<compile_context>
chip_gen: v7x
topology: tpu7x:2x2x1
jax: 0.10.0
libtpu: 0.0.40
codegen_flags: <defaults>
</compile_context>

<pallas_src>
import functools

import jax
import jax.numpy as jnp
from jax.experimental import pallas as pl
from jax.experimental.pallas import tpu as pltpu


def _psf_conv_mxu_kernel(x_ref, b_ref, o_ref, *, ksize, mxu_precision):
    """One (batch, channel) plane of the depthwise PSF conv.

    x_ref : (Hp, W)         H-padded image plane (compute dtype), VMEM
    b_ref : (k, W, Wo_pad)  banded PSF-row matrices (compute dtype), VMEM
    o_ref : (Ho, Wo_pad)    lane-dense output plane (output dtype), VMEM
    """
    Ho = o_ref.shape[0]
    xv = x_ref[...]                        # single hoisted load of the plane
    acc = jnp.zeros(o_ref.shape, jnp.float32)
    for ki in range(ksize):                # static unroll over PSF rows
        lhs = xv[ki:ki + Ho, :]            # sublane-shifted view of the value
        acc = acc + jnp.dot(lhs, b_ref[ki],
                            preferred_element_type=jnp.float32,
                            precision=mxu_precision)
    o_ref[...] = acc.astype(o_ref.dtype)


def _banded_psf_matrices(psf, W, Wo, Wo_pad, pad, dtype):
    """B[ki, w, j] = psf[ki, w - j + pad] if that tap is in range, else 0.

    (x_row @ B[ki])[j] == sum_kj x_row[j - pad + kj] * psf[ki, kj] with
    implicit zero padding along W, i.e. the W-part of F.conv2d (no flip).
    Columns j >= Wo are zero, which gives a lane-dense (multiple-of-128)
    output for free.
    """
    k = psf.shape[0]
    w_idx = jnp.arange(W)[:, None]                     # (W, 1)
    j_idx = jnp.arange(Wo_pad)[None, :]                # (1, Wo_pad)
    kj = w_idx - j_idx + pad                           # (W, Wo_pad)
    valid = (kj >= 0) & (kj < k) & (j_idx < Wo)
    kj_c = jnp.clip(kj, 0, k - 1)
    bands = psf.astype(jnp.float32)[:, kj_c]           # (k, W, Wo_pad)
    return jnp.where(valid[None, :, :], bands, 0.0).astype(dtype)


def psf_conv_generator_forward(hr_image, psf_kernel):
    """JAX/Pallas equivalent of psf_conv_generator.forward."""
    k = int(psf_kernel.shape[0])

    # ---- glue: replicate the PyTorch squeeze / reshape logic ----
    x = jnp.squeeze(hr_image)
    if x.ndim == 4:
        pass
    elif x.ndim == 3:
        x = x[None]            # (1, C, H, W)
    else:
        x = x[None, None]      # (1, 1, H, W)

    N, C, H, W = x.shape
    pad = (k - 1) // 2
    Ho = H + 2 * pad - k + 1
    Wo = W + 2 * pad - k + 1
    Wo_pad = int(pl.cdiv(Wo, 128)) * 128     # lane-dense output width

    out_dtype = x.dtype
    compute_dtype = jnp.bfloat16 if x.dtype == jnp.bfloat16 else jnp.float32
    mxu_precision = (jax.lax.Precision.HIGHEST
                     if compute_dtype == jnp.float32
                     else jax.lax.Precision.DEFAULT)

    # H-only zero pad; the W zero-pad is folded into the banded matrices.
    # TODO(synk): fuse the H pad too (pltpu.roll + row mask) to drop this copy.
    xp = jnp.pad(x.astype(compute_dtype), ((0, 0), (0, 0), (pad, pad), (0, 0)))
    Hp = H + 2 * pad

    B = _banded_psf_matrices(psf_kernel, W, Wo, Wo_pad, pad, compute_dtype)

    # VMEM budget: raise the scoped limit only when big HR planes need it.
    bpe = jnp.dtype(compute_dtype).itemsize
    vmem_need = (2 * Hp * W * bpe                                   # in (2-buf)
                 + 2 * Ho * Wo_pad * jnp.dtype(out_dtype).itemsize  # out (2-buf)
                 + 2 * k * W * Wo_pad * bpe                         # banded mats
                 + Ho * Wo_pad * 4                                  # f32 acc
                 + (1 << 20))
    cp = dict(dimension_semantics=("parallel", "parallel"))
    if vmem_need > (32 << 20):
        cp["vmem_limit_bytes"] = int(min(vmem_need, 100 << 20))

    out = pl.pallas_call(
        functools.partial(_psf_conv_mxu_kernel, ksize=k,
                          mxu_precision=mxu_precision),
        out_shape=jax.ShapeDtypeStruct((N, C, Ho, Wo_pad), out_dtype),
        grid=(N, C),
        in_specs=[
            # one (batch, channel) padded plane per grid step
            pl.BlockSpec((None, None, Hp, W), lambda n, c: (n, c, 0, 0)),
            # banded PSF matrices: constant block index -> stays resident
            pl.BlockSpec((k, W, Wo_pad), lambda n, c: (0, 0, 0)),
        ],
        out_specs=pl.BlockSpec((None, None, Ho, Wo_pad),
                               lambda n, c: (n, c, 0, 0)),
        compiler_params=pltpu.CompilerParams(**cp),
    )(xp, B)

    # Strip the lane padding in the wrapper (store inside the kernel stays
    # lane-dense / unmasked).
    return out[..., :Wo]


def _reference(hr_image, psf_kernel):
    """Pure-JAX reference (depthwise cross-correlation, same as F.conv2d)."""
    k = psf_kernel.shape[0]
    x = jnp.squeeze(hr_image)
    if x.ndim == 3:
        x = x[None]
    elif x.ndim == 2:
        x = x[None, None]
    N, C, H, W = x.shape
    pad = (k - 1) // 2
    w = jnp.broadcast_to(psf_kernel.astype(x.dtype), (C, 1, k, k))
    return jax.lax.conv_general_dilated(
        x, w, window_strides=(1, 1), padding=[(pad, pad), (pad, pad)],
        dimension_numbers=("NCHW", "OIHW", "NCHW"),
        feature_group_count=C,
        precision=jax.lax.Precision.HIGHEST)


if __name__ == "__main__":
    key = jax.random.PRNGKey(0)
    k_img, _ = jax.random.split(key)

    # Small, module-consistent shapes: batch=2, channels=4, spatial=16x16.
    x = jax.random.normal(k_img, (2, 4, 16, 16), dtype=jnp.float32)

    # Deterministic synthetic PSF: normalized 5x5 Gaussian-like kernel.
    ksize = 5
    coords = jnp.arange(ksize, dtype=jnp.float32) - (ksize - 1) / 2.0
    g = jnp.exp(-(coords ** 2) / (2.0 * 1.5 ** 2))
    psf = jnp.outer(g, g)
    psf = psf / jnp.sum(psf)

    out = jax.block_until_ready(psf_conv_generator_forward(x, psf))
    ref = jax.block_until_ready(_reference(x, psf))

    assert out.shape == ref.shape, (out.shape, ref.shape)
    err = float(jnp.max(jnp.abs(out - ref)))
    assert err < 1e-4, err

    print("KERNEL_OK")
</pallas_src>

<mosaic_0001>
module attributes {stable_mosaic.version = 11 : i64} {
  func.func @_psf_conv_mxu_kernel(%arg0: i32, %arg1: i32, %arg2: memref<1x1x20x16xf32, #tpu.memory_space<vmem>>, %arg3: memref<5x16x128xf32, #tpu.memory_space<vmem>>, %arg4: memref<1x1x16x128xf32, #tpu.memory_space<vmem>>) attributes {dimension_semantics = [#tpu.dimension_semantics<parallel>, #tpu.dimension_semantics<parallel>], iteration_bounds = array<i64: 2, 4>, scalar_prefetch = 0 : i64, scratch_operands = 0 : i64, tpu.core_type = #tpu.core_type<tc>, window_params = [{transform_indices = @transform_0, window_bounds = array<i64: 1, 1, 20, 16>}, {pipeline_mode = #tpu.pipeline_mode<synchronous>, transform_indices = @transform_1, window_bounds = array<i64: 5, 16, 128>}, {transform_indices = @transform_2, window_bounds = array<i64: 1, 1, 16, 128>}]} {
    %c0 = arith.constant 0 : index
    %c0_0 = arith.constant 0 : index
    %c0_1 = arith.constant 0 : index
    %c0_2 = arith.constant 0 : index
    %0 = vector.load %arg2[%c0, %c0_0, %c0_1, %c0_2] : memref<1x1x20x16xf32, #tpu.memory_space<vmem>>, vector<1x1x20x16xf32>
    %1 = vector.shape_cast %0 : vector<1x1x20x16xf32> to vector<20x16xf32>
    %cst = arith.constant 0.000000e+00 : f32
    %2 = vector.broadcast %cst : f32 to vector<16x128xf32>
    %3 = vector.extract_strided_slice %1 {offsets = [0, 0], sizes = [16, 16], strides = [1, 1]} : vector<20x16xf32> to vector<16x16xf32>
    %c0_3 = arith.constant 0 : index
    %c0_4 = arith.constant 0 : index
    %c0_5 = arith.constant 0 : index
    %4 = vector.load %arg3[%c0_3, %c0_4, %c0_5] : memref<5x16x128xf32, #tpu.memory_space<vmem>>, vector<1x16x128xf32>
    %5 = vector.shape_cast %4 : vector<1x16x128xf32> to vector<16x128xf32>
    %cst_6 = arith.constant dense<0.000000e+00> : vector<16x128xf32>
    %6 = tpu.matmul %3, %5, %cst_6 {dimension_numbers = #tpu.dot_dimension_numbers<[1], [0], [0], [1], [0, 0, 1, 1], [], []>, precision = #tpu.contract_precision<fp32>} : vector<16x16xf32>, vector<16x128xf32>, vector<16x128xf32> -> vector<16x128xf32>
    %7 = arith.addf %2, %6 : vector<16x128xf32>
    %8 = vector.extract_strided_slice %1 {offsets = [1, 0], sizes = [16, 16], strides = [1, 1]} : vector<20x16xf32> to vector<16x16xf32>
    %c1 = arith.constant 1 : index
    %c0_7 = arith.constant 0 : index
    %c0_8 = arith.constant 0 : index
    %9 = vector.load %arg3[%c1, %c0_7, %c0_8] : memref<5x16x128xf32, #tpu.memory_space<vmem>>, vector<1x16x128xf32>
    %10 = vector.shape_cast %9 : vector<1x16x128xf32> to vector<16x128xf32>
    %cst_9 = arith.constant dense<0.000000e+00> : vector<16x128xf32>
    %11 = tpu.matmul %8, %10, %cst_9 {dimension_numbers = #tpu.dot_dimension_numbers<[1], [0], [0], [1], [0, 0, 1, 1], [], []>, precision = #tpu.contract_precision<fp32>} : vector<16x16xf32>, vector<16x128xf32>, vector<16x128xf32> -> vector<16x128xf32>
    %12 = arith.addf %7, %11 : vector<16x128xf32>
    %13 = vector.extract_strided_slice %1 {offsets = [2, 0], sizes = [16, 16], strides = [1, 1]} : vector<20x16xf32> to vector<16x16xf32>
    %c2 = arith.constant 2 : index
    %c0_10 = arith.constant 0 : index
    %c0_11 = arith.constant 0 : index
    %14 = vector.load %arg3[%c2, %c0_10, %c0_11] : memref<5x16x128xf32, #tpu.memory_space<vmem>>, vector<1x16x128xf32>
    %15 = vector.shape_cast %14 : vector<1x16x128xf32> to vector<16x128xf32>
    %cst_12 = arith.constant dense<0.000000e+00> : vector<16x128xf32>
    %16 = tpu.matmul %13, %15, %cst_12 {dimension_numbers = #tpu.dot_dimension_numbers<[1], [0], [0], [1], [0, 0, 1, 1], [], []>, precision = #tpu.contract_precision<fp32>} : vector<16x16xf32>, vector<16x128xf32>, vector<16x128xf32> -> vector<16x128xf32>
    %17 = arith.addf %12, %16 : vector<16x128xf32>
    %18 = vector.extract_strided_slice %1 {offsets = [3, 0], sizes = [16, 16], strides = [1, 1]} : vector<20x16xf32> to vector<16x16xf32>
    %c3 = arith.constant 3 : index
    %c0_13 = arith.constant 0 : index
    %c0_14 = arith.constant 0 : index
    %19 = vector.load %arg3[%c3, %c0_13, %c0_14] : memref<5x16x128xf32, #tpu.memory_space<vmem>>, vector<1x16x128xf32>
    %20 = vector.shape_cast %19 : vector<1x16x128xf32> to vector<16x128xf32>
    %cst_15 = arith.constant dense<0.000000e+00> : vector<16x128xf32>
    %21 = tpu.matmul %18, %20, %cst_15 {dimension_numbers = #tpu.dot_dimension_numbers<[1], [0], [0], [1], [0, 0, 1, 1], [], []>, precision = #tpu.contract_precision<fp32>} : vector<16x16xf32>, vector<16x128xf32>, vector<16x128xf32> -> vector<16x128xf32>
    %22 = arith.addf %17, %21 : vector<16x128xf32>
    %23 = vector.extract_strided_slice %1 {offsets = [4, 0], sizes = [16, 16], strides = [1, 1]} : vector<20x16xf32> to vector<16x16xf32>
    %c4 = arith.constant 4 : index
    %c0_16 = arith.constant 0 : index
    %c0_17 = arith.constant 0 : index
    %24 = vector.load %arg3[%c4, %c0_16, %c0_17] : memref<5x16x128xf32, #tpu.memory_space<vmem>>, vector<1x16x128xf32>
    %25 = vector.shape_cast %24 : vector<1x16x128xf32> to vector<16x128xf32>
    %cst_18 = arith.constant dense<0.000000e+00> : vector<16x128xf32>
    %26 = tpu.matmul %23, %25, %cst_18 {dimension_numbers = #tpu.dot_dimension_numbers<[1], [0], [0], [1], [0, 0, 1, 1], [], []>, precision = #tpu.contract_precision<fp32>} : vector<16x16xf32>, vector<16x128xf32>, vector<16x128xf32> -> vector<16x128xf32>
    %27 = arith.addf %22, %26 : vector<16x128xf32>
    %c0_19 = arith.constant 0 : index
    %c0_20 = arith.constant 0 : index
    %c0_21 = arith.constant 0 : index
    %c0_22 = arith.constant 0 : index
    %28 = vector.load %arg4[%c0_19, %c0_20, %c0_21, %c0_22] : memref<1x1x16x128xf32, #tpu.memory_space<vmem>>, vector<1x1x16x128xf32>
    %29 = vector.shape_cast %28 : vector<1x1x16x128xf32> to vector<16x128xf32>
    %30 = vector.shape_cast %27 : vector<16x128xf32> to vector<1x1x16x128xf32>
    tpu.vector_store %arg4[%c0_19, %c0_20, %c0_21, %c0_22], %30 {strides = array<i32>} : memref<1x1x16x128xf32, #tpu.memory_space<vmem>>, vector<1x1x16x128xf32>,
    return
  }
  func.func @transform_0(%arg0: i32, %arg1: i32) -> (i32, i32, i32, i32) {
    %c0_i32 = arith.constant 0 : i32
    %c0_i32_0 = arith.constant 0 : i32
    %c0_i32_1 = arith.constant 0 : i32
    return %arg0, %arg1, %c0_i32, %c0_i32_0 : i32, i32, i32, i32
  }
  func.func @transform_1(%arg0: i32, %arg1: i32) -> (i32, i32, i32) {
    %c0_i32 = arith.constant 0 : i32
    %c0_i32_0 = arith.constant 0 : i32
    %c0_i32_1 = arith.constant 0 : i32
    %c0_i32_2 = arith.constant 0 : i32
    return %c0_i32, %c0_i32_0, %c0_i32_1 : i32, i32, i32
  }
  func.func @transform_2(%arg0: i32, %arg1: i32) -> (i32, i32, i32, i32) {
    %c0_i32 = arith.constant 0 : i32
    %c0_i32_0 = arith.constant 0 : i32
    %c0_i32_1 = arith.constant 0 : i32
    return %arg0, %arg1, %c0_i32, %c0_i32_0 : i32, i32, i32, i32
  }
}

</mosaic_0001>

<llo_original>
// kernel: tpu_custom_call.1
$region0: #{tpu_custom_call.1}
  #allocation0 [shape = 'u32[]', space=smem, size = 0x4, offset = 0x4, fixed_abs, tag = 'smem constant byte address 0x4 - core index']
  #allocation1 [shape = 'u32[144,128]{1,0:T(1,128)}', space=vmem, size = 0x12000, scoped, tag = 'internal scratch']
  %s0 = inlined_call_operand.vmem [shape: f32[2,4,20,16], index: 0, kind: input, shape index: {}]
  %s1 = inlined_call_operand.vmem [shape: f32[5,16,128], index: 1, kind: input, shape index: {}]
  %s2 = inlined_call_operand.hbm [shape: f32[2,4,16,128], index: 2, kind: output, shape index: {}]
  %s3 = sld [smem:[#allocation0]]
  $region41: #{tpu_custom_call.1} parent=0
    _
  %s5 = ssub.s32 1, %s3
  %s6 = scalar_select 0, %s5, %s3
  $region1: #{tpu_custom_call.1} parent=0
    #allocation2 [shape = 'u8[16384]{0}', space=vmem, size = 0x4000, scoped, tag = 'output window, operand 0']
    #allocation3 [shape = 's32[2]{0}', space=sflag, size = 0x8, scoped, tag = 'scoped memory for tpu_custom_call.1']
    %7 = vsyncpa [#allocation3], 0
    %s8 = scalar_lea.sflag [#allocation3], 1
    %9 = vsyncpa %s8, 0
    loop: start=0, step=1, limit=10
    $region2: #{tpu_custom_call.1} parent=1 // loop_pre_header
      _
    $region3: #{tpu_custom_call.1} parent=1 // loop_header
      %s11 = sphi 0, %s15
      %p12 = scmp.ge.s32.totalorder %s11, 10
      %s18 = sphi 0, %s30
      %s19 = sphi 0, %s26
      %s20 = sphi 0, %s18
      %s21 = sphi 0, %s19
      %s22 = sphi 0, %s20
      %s23 = sphi 0, %s21
      %s35 = sphi 0, %s37
      %s38 = sphi 0, %s35
      %s39 = sphi 0, %s38
      %s55 = sphi 0, %s39
      %s59 = sphi 0, %s59
      %s61 = sphi 0, %s59
      %s62 = sphi 0, %s61
      %s76 = sphi 0, %s62
      %s84 = sphi 0, %s86
      %s87 = sphi 0, %s84
      %s88 = sphi 0, %s87
      %s104 = sphi 0, %s88
    $region4: #{tpu_custom_call.1} parent=1 // loop_header_branch
      %14 = sbr.rel (%p12) target = $region8
    $region5: #{tpu_custom_call.1} parent=1 // loop_body
      %s16 = ssub.s32 %s11, 1
      %s17 = ssub.s32 %s11, 2
      %s24 = sadd.s32 1, %s19
      %p25 = scmp.ge.s32.totalorder %s24, 4
      %s26 = scalar_select %p25, 0, %s24
      %s27 = sadd.s32 1, %s18
      %s28 = scalar_select %p25, %s27, %s18
      %p29 = scmp.ge.s32.totalorder %s28, 2
      %s30 = scalar_select %p29, 0, %s28
      %s31 = ssub.s32 %s18, %s30
      %s32 = ssub.s32 %s19, %s26
      %s33 = sor.u32 %s31, %s32
      %p34 = scmp.eq.s32.totalorder %s33, 0
      %s36 = sadd.s32 %s35, 1
      %s37 = scalar_select %p34, %s35, %s36
      %p40 = pneg %p34
      %p41 = scmp.eq.s32.totalorder %s11, 7
      %p42 = por %p40, %p41
      %p43 = scmp.ne.s32.totalorder %s35, %s38
      %p44 = scmp.eq.s32.totalorder %s11, 0
      %p45 = por %p43, %p44
      %p46 = scmp.ne.s32.totalorder %s35, %s38
      %p47 = scmp.eq.s32.totalorder %s16, 7
      %p48 = por %p46, %p47
      %p49 = scmp.ne.s32.totalorder %s38, %s39
      %p50 = scmp.eq.s32.totalorder %s16, 0
      %p51 = por %p49, %p50
      %p52 = scmp.ne.s32.totalorder %s38, %s39
      %p53 = scmp.eq.s32.totalorder %s17, 7
      %p54 = por %p52, %p53
      %p56 = scmp.ne.s32.totalorder %s39, %s55
      %p57 = scmp.eq.s32.totalorder %s17, 0
      %p58 = por %p56, %p57
      %s60 = sadd.s32 %s59, 1
      %p63 = scmp.eq.s32.totalorder %s11, 7
      %p64 = scmp.ne.s32.totalorder %s59, %s61
      %p65 = scmp.eq.s32.totalorder %s11, 0
      %p66 = por %p64, %p65
      %p67 = scmp.ne.s32.totalorder %s59, %s61
      %p68 = scmp.eq.s32.totalorder %s16, 7
      %p69 = por %p67, %p68
      %p70 = scmp.ne.s32.totalorder %s61, %s62
      %p71 = scmp.eq.s32.totalorder %s16, 0
      %p72 = por %p70, %p71
      %p73 = scmp.ne.s32.totalorder %s61, %s62
      %p74 = scmp.eq.s32.totalorder %s17, 7
      %p75 = por %p73, %p74
      %p77 = scmp.ne.s32.totalorder %s62, %s76
      %p78 = scmp.eq.s32.totalorder %s17, 0
      %p79 = por %p77, %p78
      %s80 = ssub.s32 %s18, %s30
      %s81 = ssub.s32 %s19, %s26
      %s82 = sor.u32 %s80, %s81
      %p83 = scmp.eq.s32.totalorder %s82, 0
      %s85 = sadd.s32 %s84, 1
      %s86 = scalar_select %p83, %s84, %s85
      %p89 = pneg %p83
      %p90 = scmp.eq.s32.totalorder %s11, 7
      %p91 = por %p89, %p90
      %p92 = scmp.ne.s32.totalorder %s84, %s87
      %p93 = scmp.eq.s32.totalorder %s11, 0
      %p94 = por %p92, %p93
      %p95 = scmp.ne.s32.totalorder %s84, %s87
      %p96 = scmp.eq.s32.totalorder %s16, 7
      %p97 = por %p95, %p96
      %p98 = scmp.ne.s32.totalorder %s87, %s88
      %p99 = scmp.eq.s32.totalorder %s16, 0
      %p100 = por %p98, %p99
      %p101 = scmp.ne.s32.totalorder %s87, %s88
      %p102 = scmp.eq.s32.totalorder %s17, 7
      %p103 = por %p101, %p102
      %p105 = scmp.ne.s32.totalorder %s88, %s104
      %p106 = scmp.eq.s32.totalorder %s17, 0
      %p107 = por %p105, %p106
      %p108 = scmp.le.s32.totalorder 1, %s11
      %p109 = scmp.lt.s32.totalorder %s11, 9
      %p110 = pnand %p108, %p109
      %p111 = pneg %p110
      // Predicated region
      $region9: #{tpu_custom_call.1} parent=5 // pred_check
        _
      $region10: #{tpu_custom_call.1} parent=5 // pred_check_branch
        %113 = sbr.rel (%p110) target = $region12
      $region11: #{tpu_custom_call.1} parent=5 // pred_region
        %s114 = ssub.s32 %s11, 1
        // Predicated region
        $region13: #{tpu_custom_call.1} parent=11 // pred_check
          %p115 = pneg %p72
        $region14: #{tpu_custom_call.1} parent=11 // pred_check_branch
          %117 = sbr.rel (%p115) target = $region16
        $region15: #{tpu_custom_call.1} parent=11 // pred_region
          _
        $region16: #{tpu_custom_call.1} parent=11 // pred_fallthru
          _
      $region12: #{tpu_custom_call.1} parent=5 // pred_fallthru
        _
      %p118 = scmp.lt.s32.totalorder %s11, 8
      // Predicated region
      $region17: #{tpu_custom_call.1} parent=5 // pred_check
        %p119 = pneg %p118
      $region18: #{tpu_custom_call.1} parent=5 // pred_check_branch
        %121 = sbr.rel (%p119) target = $region20
      $region19: #{tpu_custom_call.1} parent=5 // pred_region
        // Predicated region
        $region21: #{tpu_custom_call.1} parent=19 // pred_check
          %p122 = pneg %p45
        $region22: #{tpu_custom_call.1} parent=19 // pred_check_branch
          %124 = sbr.rel (%p122) target = $region24
        $region23: #{tpu_custom_call.1} parent=19 // pred_region
          %p125 = scmp.lt.s32.totalorder %s18, 1
          %s126 = scalar_select %p125, %s18, 1
          %p127 = scmp.lt.s32.totalorder %s19, 3
          %s128 = scalar_select %p127, %s19, 3
          %s129 = smul.addr %s128, 3
          %s130 = smul.addr %s126, 12
          %s131 = sadd.s32 %s129, %s130
          %s132 = smul.addr %s131, 8
          %s133 = scalar_lea.vmem %s0, %s132
        $region24: #{tpu_custom_call.1} parent=19 // pred_fallthru
          _
      $region20: #{tpu_custom_call.1} parent=5 // pred_fallthru
        _
      %p134 = scmp.le.s32.totalorder 1, %s11
      %p135 = scmp.lt.s32.totalorder %s11, 9
      %p136 = pnand %p134, %p135
      %p137 = pneg %p136
      // Predicated region
      $region25: #{tpu_custom_call.1} parent=5 // pred_check
        _
      $region26: #{tpu_custom_call.1} parent=5 // pred_check_branch
        %139 = sbr.rel (%p136) target = $region28
      $region27: #{tpu_custom_call.1} parent=5 // pred_region
        %s140 = ssub.s32 %s11, 1
        %p141 = scmp.lt.s32.totalorder %s20, 1
        %s142 = scalar_select %p141, %s20, 1
        %p143 = scmp.lt.s32.totalorder %s21, 3
        %s144 = scalar_select %p143, %s21, 3
        %s145 = smul.addr %s144, 3
        %s146 = smul.addr %s142, 12
        %s147 = sadd.s32 %s145, %s146
        %s148 = smul.addr %s147, 8
        %s149 = scalar_lea.vmem %s0, %s148
        %p150 = pneg %p51
        %p151 = pneg %p48
        %p152 = pneg %p72
        %p153 = pneg %p69
        %p154 = pneg %p100
        %p155 = pneg %p97
        %s156 = sand.u32 %s87, 1
        %s157 = scalar_lea.sflag [#allocation3], %s156
        %s158 = sand.u32 %s87, 1
        %s159 = smul.addr %s158, 16
        %s160 = scalar_lea.vmem [#allocation2], %s159
        %p161 = scmp.lt.s32.totalorder %s20, 1
        %s162 = scalar_select %p161, %s20, 1
        %p163 = scmp.lt.s32.totalorder %s21, 3
        %s164 = scalar_select %p163, %s21, 3
        %s165 = smul.addr %s164, 3
        %s166 = smul.addr %s162, 12
        %s167 = sadd.s32 %s165, %s166
        %s168 = smul.addr %s167, 8
        %s169 = scalar_lea.vmem %s0, %s168
        %v170 = vld [vmem:[%s169] sm:$0xff]
        %v171 = vld [vmem:[%s169 + $0x8] sm:$0xff]
        %v172 = vld [vmem:[%s169 + $0x10] sm:$0xf]
        %v173 = vld [vmem:[%s1] sm:$0xff]
        %v174 = vld [vmem:[%s1 + $0x8] sm:$0xff]
        %s175 = scalar_lea.vmem %s1, 16
        %v176 = vld [vmem:[%s175] sm:$0xff]
        %v177 = vld [vmem:[%s175 + $0x8] sm:$0xff]
        %vm181 = vcmask 1046528
        %v182 = vrot.slane %v170, 1
        %v183 = vrot.slane %v171, 1
        %v184 = vsel %vm181, %v182, %v183
        %v185 = vrot.slane %v172, 1
        %v186 = vsel %vm181, %v183, %v185
        %vm187 = vcmask 130048
        %v188 = vsel %vm187, %v184, 0
        %v190 = vsel %vm187, %v186, 0
        %192 = vmatprep.subr.mxu0 0.0
        %v193 = vand.u32 %v176, 4294901760
        %194 = vmatpush1.msra.mxu0 %v193
        %195 = vmatprep.subr.mxu0 0.0
        %v196 = vand.u32 %v177, 4294901760
        %197 = vmatpush1.msra.mxu0 %v196
        %198 = vmatprep.subr.mxu0 0.0
        %199 = vmatpush1.msra.mxu0 0.0
        %200 = vmatprep.subr.mxu0 0.0
        %201 = vmatpush1.msra.mxu0 0.0
        %202 = vmatprep.subr.mxu0 0.0
        %203 = vmatpush1.msra.mxu0 0.0
        %204 = vmatprep.subr.mxu0 0.0
        %205 = vmatpush1.msra.mxu0 0.0
        %206 = vmatprep.subr.mxu0 0.0
        %207 = vmatpush1.msra.mxu0 0.0
        %208 = vmatprep.subr.mxu0 0.0
        %209 = vmatpush1.msra.mxu0 0.0
        %210 = vmatprep.subr.mxu0 0.0
        %211 = vmatpush1.msra.mxu0 0.0
        %212 = vmatprep.subr.mxu0 0.0
        %213 = vmatpush1.msra.mxu0 0.0
        %214 = vmatprep.subr.mxu0 0.0
        %215 = vmatpush1.msra.mxu0 0.0
        %216 = vmatprep.subr.mxu0 0.0
        %217 = vmatpush1.msra.mxu0 0.0
        %218 = vmatprep.subr.mxu0 0.0
        %219 = vmatpush1.msra.mxu0 0.0
        %220 = vmatprep.subr.mxu0 0.0
        %221 = vmatpush1.msra.mxu0 0.0
        %222 = vmatprep.subr.mxu0 0.0
        %223 = vmatpush1.msra.mxu0 0.0
        %224 = vmatprep.subr.mxu0 0.0
        %225 = vmatpush1.msra.mxu0 0.0
        %226 = vmatprep.subr.mxu0 0.0
        %227 = vmatpush1.msra.mxu0 0.0
        %228 = vmatprep.subr.mxu0 0.0
        %229 = vmatpush1.msra.mxu0 0.0
        %230 = vmatprep.subr.mxu0 0.0
        %231 = vmatpush1.msra.mxu0 0.0
        %232 = vmatprep.subr.mxu0 0.0
        %233 = vmatpush1.msra.mxu0 0.0
        %234 = vmatprep.subr.mxu0 0.0
        %235 = vmatpush1.msra.mxu0 0.0
        %236 = vmatprep.subr.mxu0 0.0
        %237 = vmatpush1.msra.mxu0 0.0
        %238 = vmatprep.subr.mxu0 0.0
        %239 = vmatpush1.msra.mxu0 0.0
        %240 = vmatprep.subr.mxu0 0.0
        %241 = vmatpush1.msra.mxu0 0.0
        %242 = vmatprep.subr.mxu0 0.0
        %243 = vmatpush1.msra.mxu0 0.0
        %244 = vmatprep.subr.mxu0 0.0
        %245 = vmatpush1.msra.mxu0 0.0
        %246 = vmatprep.subr.mxu0 0.0
        %247 = vmatpush1.msra.mxu0 0.0
        %248 = vmatprep.subr.mxu0 0.0
        %249 = vmatpush1.msra.mxu0 0.0
        %250 = vmatprep.subr.mxu0 0.0
        %251 = vmatpush1.msra.mxu0 0.0
        %252 = vmatprep.subr.mxu0 0.0
        %253 = vmatpush1.msra.mxu0 0.0
        %254 = vmatprep.subr.mxu0 0.0
        %255 = vmatpush1.msra.mxu0 0.0
        %256 = vmatprep.subr.mxu0 0.0
        %257 = vmatpush1.msra.mxu0 0.0
        %258 = vmatprep.mubr.f32.mxu0 0.0
        %v259 = vand.u32 %v188, 4294901760
        %v260 = vsub.f32 %v188, %v259
        %v261 = vand.u32 %v260, 4294901760
        %v262 = vsub.f32 %v260, %v261
        %v263 = vand.u32 %v262, 4294901760
        %264 = vmatmul.mubr.f32.gmra.mrb[0].mxu0 %v263
        %v265 = vpop.f32.mrb[0].mxu0
        %v266 = vadd.f32 0.0, %v265
        %v267 = vpop.f32.mrb[0].mxu0
        %268 = vmatprep.mubr.f32.mxu0 0.0
        %v269 = vand.u32 %v190, 4294901760
        %v270 = vsub.f32 %v190, %v269
        %v271 = vand.u32 %v270, 4294901760
        %v272 = vsub.f32 %v270, %v271
        %v273 = vand.u32 %v272, 4294901760
        %274 = vmatmul.mubr.f32.gmra.mrb[0].mxu0 %v273
        %v275 = vpop.f32.mrb[0].mxu0
        %v276 = vadd.f32 0.0, %v275
        %v277 = vpop.f32.mrb[0].mxu0
        %278 = vdwg.mxu0
        %279 = vmatprep.subr.mxu0 0.0
        %v280 = vand.u32 %v176, 4294901760
        %v281 = vsub.f32 %v176, %v280
        %v282 = vand.u32 %v281, 4294901760
        %v283 = vsub.f32 %v281, %v282
        %v284 = vand.u32 %v283, 4294901760
        %285 = vmatpush1.msra.mxu0 %v284
        %286 = vmatprep.subr.mxu0 0.0
        %v287 = vand.u32 %v177, 4294901760
        %v288 = vsub.f32 %v177, %v287
        %v289 = vand.u32 %v288, 4294901760
        %v290 = vsub.f32 %v288, %v289
        %v291 = vand.u32 %v290, 4294901760
        %292 = vmatpush1.msra.mxu0 %v291
        %293 = vmatprep.subr.mxu0 0.0
        %294 = vmatpush1.msra.mxu0 0.0
        %295 = vmatprep.subr.mxu0 0.0
        %296 = vmatpush1.msra.mxu0 0.0
        %297 = vmatprep.subr.mxu0 0.0
        %298 = vmatpush1.msra.mxu0 0.0
        %299 = vmatprep.subr.mxu0 0.0
        %300 = vmatpush1.msra.mxu0 0.0
        %301 = vmatprep.subr.mxu0 0.0
        %302 = vmatpush1.msra.mxu0 0.0
        %303 = vmatprep.subr.mxu0 0.0
        %304 = vmatpush1.msra.mxu0 0.0
        %305 = vmatprep.subr.mxu0 0.0
        %306 = vmatpush1.msra.mxu0 0.0
        %307 = vmatprep.subr.mxu0 0.0
        %308 = vmatpush1.msra.mxu0 0.0
        %309 = vmatprep.subr.mxu0 0.0
        %310 = vmatpush1.msra.mxu0 0.0
        %311 = vmatprep.subr.mxu0 0.0
        %312 = vmatpush1.msra.mxu0 0.0
        %313 = vmatprep.subr.mxu0 0.0
        %314 = vmatpush1.msra.mxu0 0.0
        %315 = vmatprep.subr.mxu0 0.0
        %316 = vmatpush1.msra.mxu0 0.0
        %317 = vmatprep.subr.mxu0 0.0
        %318 = vmatpush1.msra.mxu0 0.0
        %319 = vmatprep.subr.mxu0 0.0
        %320 = vmatpush1.msra.mxu0 0.0
        %321 = vmatprep.subr.mxu0 0.0
        %322 = vmatpush1.msra.mxu0 0.0
        %323 = vmatprep.subr.mxu0 0.0
        %324 = vmatpush1.msra.mxu0 0.0
        %325 = vmatprep.subr.mxu0 0.0
        %326 = vmatpush1.msra.mxu0 0.0
        %327 = vmatprep.subr.mxu0 0.0
        %328 = vmatpush1.msra.mxu0 0.0
        %329 = vmatprep.subr.mxu0 0.0
        %330 = vmatpush1.msra.mxu0 0.0
        %331 = vmatprep.subr.mxu0 0.0
        %332 = vmatpush1.msra.mxu0 0.0
        %333 = vmatprep.subr.mxu0 0.0
        %334 = vmatpush1.msra.mxu0 0.0
        %335 = vmatprep.subr.mxu0 0.0
        %336 = vmatpush1.msra.mxu0 0.0
        %337 = vmatprep.subr.mxu0 0.0
        %338 = vmatpush1.msra.mxu0 0.0
        %339 = vmatprep.subr.mxu0 0.0
        %340 = vmatpush1.msra.mxu0 0.0
        %341 = vmatprep.subr.mxu0 0.0
        %342 = vmatpush1.msra.mxu0 0.0
        %343 = vmatprep.subr.mxu0 0.0
        %344 = vmatpush1.msra.mxu0 0.0
        %345 = vmatprep.subr.mxu0 0.0
        %346 = vmatpush1.msra.mxu0 0.0
        %347 = vmatprep.subr.mxu0 0.0
        %348 = vmatpush1.msra.mxu0 0.0
        %349 = vmatprep.subr.mxu0 0.0
        %350 = vmatpush1.msra.mxu0 0.0
        %351 = vmatprep.subr.mxu0 0.0
        %352 = vmatpush1.msra.mxu0 0.0
        %353 = vmatprep.mubr.f32.mxu0 0.0
        %v354 = vand.u32 %v188, 4294901760
        %355 = vmatmul.mubr.f32.gmra.mrb[0].mxu0 %v354
        %v356 = vpop.f32.mrb[0].mxu0
        %v357 = vadd.f32 %v266, %v356
        %v358 = vpop.f32.mrb[0].mxu0
        %359 = vmatprep.mubr.f32.mxu0 0.0
        %v360 = vand.u32 %v190, 4294901760
        %361 = vmatmul.mubr.f32.gmra.mrb[0].mxu0 %v360
        %v362 = vpop.f32.mrb[0].mxu0
        %v363 = vadd.f32 %v276, %v362
        %v364 = vpop.f32.mrb[0].mxu0
        %365 = vdwg.mxu0
        %366 = vmatprep.subr.mxu0 0.0
        %v367 = vand.u32 %v176, 4294901760
        %v368 = vsub.f32 %v176, %v367
        %369 = vmatpush1.msra.mxu0 %v368
        %370 = vmatprep.subr.mxu0 0.0
        %v371 = vand.u32 %v177, 4294901760
        %v372 = vsub.f32 %v177, %v371
        %373 = vmatpush1.msra.mxu0 %v372
        %374 = vmatprep.subr.mxu0 0.0
        %375 = vmatpush1.msra.mxu0 0.0
        %376 = vmatprep.subr.mxu0 0.0
        %377 = vmatpush1.msra.mxu0 0.0
        %378 = vmatprep.subr.mxu0 0.0
        %379 = vmatpush1.msra.mxu0 0.0
        %380 = vmatprep.subr.mxu0 0.0
        %381 = vmatpush1.msra.mxu0 0.0
        %382 = vmatprep.subr.mxu0 0.0
        %383 = vmatpush1.msra.mxu0 0.0
        %384 = vmatprep.subr.mxu0 0.0
        %385 = vmatpush1.msra.mxu0 0.0
        %386 = vmatprep.subr.mxu0 0.0
        %387 = vmatpush1.msra.mxu0 0.0
        %388 = vmatprep.subr.mxu0 0.0
        %389 = vmatpush1.msra.mxu0 0.0
        %390 = vmatprep.subr.mxu0 0.0
        %391 = vmatpush1.msra.mxu0 0.0
        %392 = vmatprep.subr.mxu0 0.0
        %393 = vmatpush1.msra.mxu0 0.0
        %394 = vmatprep.subr.mxu0 0.0
        %395 = vmatpush1.msra.mxu0 0.0
        %396 = vmatprep.subr.mxu0 0.0
        %397 = vmatpush1.msra.mxu0 0.0
        %398 = vmatprep.subr.mxu0 0.0
        %399 = vmatpush1.msra.mxu0 0.0
        %400 = vmatprep.subr.mxu0 0.0
        %401 = vmatpush1.msra.mxu0 0.0
        %402 = vmatprep.subr.mxu0 0.0
        %403 = vmatpush1.msra.mxu0 0.0
        %404 = vmatprep.subr.mxu0 0.0
        %405 = vmatpush1.msra.mxu0 0.0
        %406 = vmatprep.subr.mxu0 0.0
        %407 = vmatpush1.msra.mxu0 0.0
        %408 = vmatprep.subr.mxu0 0.0
        %409 = vmatpush1.msra.mxu0 0.0
        %410 = vmatprep.subr.mxu0 0.0
        %411 = vmatpush1.msra.mxu0 0.0
        %412 = vmatprep.subr.mxu0 0.0
        %413 = vmatpush1.msra.mxu0 0.0
        %414 = vmatprep.subr.mxu0 0.0
        %415 = vmatpush1.msra.mxu0 0.0
        %416 = vmatprep.subr.mxu0 0.0
        %417 = vmatpush1.msra.mxu0 0.0
        %418 = vmatprep.subr.mxu0 0.0
        %419 = vmatpush1.msra.mxu0 0.0
        %420 = vmatprep.subr.mxu0 0.0
        %421 = vmatpush1.msra.mxu0 0.0
        %422 = vmatprep.subr.mxu0 0.0
        %423 = vmatpush1.msra.mxu0 0.0
        %424 = vmatprep.subr.mxu0 0.0
        %425 = vmatpush1.msra.mxu0 0.0
        %426 = vmatprep.subr.mxu0 0.0
        %427 = vmatpush1.msra.mxu0 0.0
        %428 = vmatprep.subr.mxu0 0.0
        %429 = vmatpush1.msra.mxu0 0.0
        %430 = vmatprep.subr.mxu0 0.0
        %431 = vmatpush1.msra.mxu0 0.0
        %432 = vmatprep.subr.mxu0 0.0
        %433 = vmatpush1.msra.mxu0 0.0
        %434 = vmatprep.mubr.f32.mxu0 0.0
        %v435 = vand.u32 %v188, 4294901760
        %v436 = vsub.f32 %v188, %v435
        %437 = vmatmul.mubr.f32.gmra.mrb[0].mxu0 %v436
        %v438 = vpop.f32.mrb[0].mxu0
        %v439 = vadd.f32 %v357, %v438
        %v440 = vpop.f32.mrb[0].mxu0
        %441 = vmatprep.mubr.f32.mxu0 0.0
        %v442 = vand.u32 %v190, 4294901760
        %v443 = vsub.f32 %v190, %v442
        %444 = vmatmul.mubr.f32.gmra.mrb[0].mxu0 %v443
        %v445 = vpop.f32.mrb[0].mxu0
        %v446 = vadd.f32 %v363, %v445
        %v447 = vpop.f32.mrb[0].mxu0
        %448 = vdwg.mxu0
        %449 = vmatprep.subr.mxu0 0.0
        %v450 = vand.u32 %v176, 4294901760
        %451 = vmatpush1.msra.mxu0 %v450
        %452 = vmatprep.subr.mxu0 0.0
        %v453 = vand.u32 %v177, 4294901760
        %454 = vmatpush1.msra.mxu0 %v453
        %455 = vmatprep.subr.mxu0 0.0
        %456 = vmatpush1.msra.mxu0 0.0
        %457 = vmatprep.subr.mxu0 0.0
        %458 = vmatpush1.msra.mxu0 0.0
        %459 = vmatprep.subr.mxu0 0.0
        %460 = vmatpush1.msra.mxu0 0.0
        %461 = vmatprep.subr.mxu0 0.0
        %462 = vmatpush1.msra.mxu0 0.0
        %463 = vmatprep.subr.mxu0 0.0
        %464 = vmatpush1.msra.mxu0 0.0
        %465 = vmatprep.subr.mxu0 0.0
        %466 = vmatpush1.msra.mxu0 0.0
        %467 = vmatprep.subr.mxu0 0.0
        %468 = vmatpush1.msra.mxu0 0.0
        %469 = vmatprep.subr.mxu0 0.0
        %470 = vmatpush1.msra.mxu0 0.0
        %471 = vmatprep.subr.mxu0 0.0
        %472 = vmatpush1.msra.mxu0 0.0
        %473 = vmatprep.subr.mxu0 0.0
        %474 = vmatpush1.msra.mxu0 0.0
        %475 = vmatprep.subr.mxu0 0.0
        %476 = vmatpush1.msra.mxu0 0.0
        %477 = vmatprep.subr.mxu0 0.0
        %478 = vmatpush1.msra.mxu0 0.0
        %479 = vmatprep.subr.mxu0 0.0
        %480 = vmatpush1.msra.mxu0 0.0
        %481 = vmatprep.subr.mxu0 0.0
        %482 = vmatpush1.msra.mxu0 0.0
        %483 = vmatprep.subr.mxu0 0.0
        %484 = vmatpush1.msra.mxu0 0.0
        %485 = vmatprep.subr.mxu0 0.0
        %486 = vmatpush1.msra.mxu0 0.0
        %487 = vmatprep.subr.mxu0 0.0
        %488 = vmatpush1.msra.mxu0 0.0
        %489 = vmatprep.subr.mxu0 0.0
        %490 = vmatpush1.msra.mxu0 0.0
        %491 = vmatprep.subr.mxu0 0.0
        %492 = vmatpush1.msra.mxu0 0.0
        %493 = vmatprep.subr.mxu0 0.0
        %494 = vmatpush1.msra.mxu0 0.0
        %495 = vmatprep.subr.mxu0 0.0
        %496 = vmatpush1.msra.mxu0 0.0
        %497 = vmatprep.subr.mxu0 0.0
        %498 = vmatpush1.msra.mxu0 0.0
        %499 = vmatprep.subr.mxu0 0.0
        %500 = vmatpush1.msra.mxu0 0.0
        %501 = vmatprep.subr.mxu0 0.0
        %502 = vmatpush1.msra.mxu0 0.0
        %503 = vmatprep.subr.mxu0 0.0
        %504 = vmatpush1.msra.mxu0 0.0
        %505 = vmatprep.subr.mxu0 0.0
        %506 = vmatpush1.msra.mxu0 0.0
        %507 = vmatprep.subr.mxu0 0.0
        %508 = vmatpush1.msra.mxu0 0.0
        %509 = vmatprep.subr.mxu0 0.0
        %510 = vmatpush1.msra.mxu0 0.0
        %511 = vmatprep.subr.mxu0 0.0
        %512 = vmatpush1.msra.mxu0 0.0
        %513 = vmatprep.subr.mxu0 0.0
        %514 = vmatpush1.msra.mxu0 0.0
        %515 = vmatprep.mubr.f32.mxu0 0.0
        %v516 = vand.u32 %v188, 4294901760
        %v517 = vsub.f32 %v188, %v516
        %v518 = vand.u32 %v517, 4294901760
        %519 = vmatmul.mubr.f32.gmra.mrb[0].mxu0 %v518
        %v520 = vpop.f32.mrb[0].mxu0
        %v521 = vadd.f32 %v439, %v520
        %v522 = vpop.f32.mrb[0].mxu0
        %523 = vmatprep.mubr.f32.mxu0 0.0
        %v524 = vand.u32 %v190, 4294901760
        %v525 = vsub.f32 %v190, %v524
        %v526 = vand.u32 %v525, 4294901760
        %527 = vmatmul.mubr.f32.gmra.mrb[0].mxu0 %v526
        %v528 = vpop.f32.mrb[0].mxu0
        %v529 = vadd.f32 %v446, %v528
        %v530 = vpop.f32.mrb[0].mxu0
        %531 = vdwg.mxu0
        %532 = vmatprep.subr.mxu0 0.0
        %v533 = vand.u32 %v176, 4294901760
        %v534 = vsub.f32 %v176, %v533
        %v535 = vand.u32 %v534, 4294901760
        %536 = vmatpush1.msra.mxu0 %v535
        %537 = vmatprep.subr.mxu0 0.0
        %v538 = vand.u32 %v177, 4294901760
        %v539 = vsub.f32 %v177, %v538
        %v540 = vand.u32 %v539, 4294901760
        %541 = vmatpush1.msra.mxu0 %v540
        %542 = vmatprep.subr.mxu0 0.0
        %543 = vmatpush1.msra.mxu0 0.0
        %544 = vmatprep.subr.mxu0 0.0
        %545 = vmatpush1.msra.mxu0 0.0
        %546 = vmatprep.subr.mxu0 0.0
        %547 = vmatpush1.msra.mxu0 0.0
        %548 = vmatprep.subr.mxu0 0.0
        %549 = vmatpush1.msra.mxu0 0.0
        %550 = vmatprep.subr.mxu0 0.0
        %551 = vmatpush1.msra.mxu0 0.0
        %552 = vmatprep.subr.mxu0 0.0
        %553 = vmatpush1.msra.mxu0 0.0
        %554 = vmatprep.subr.mxu0 0.0
        %555 = vmatpush1.msra.mxu0 0.0
        %556 = vmatprep.subr.mxu0 0.0
        %557 = vmatpush1.msra.mxu0 0.0
        %558 = vmatprep.subr.mxu0 0.0
        %559 = vmatpush1.msra.mxu0 0.0
        %560 = vmatprep.subr.mxu0 0.0
        %561 = vmatpush1.msra.mxu0 0.0
        %562 = vmatprep.subr.mxu0 0.0
        %563 = vmatpush1.msra.mxu0 0.0
        %564 = vmatprep.subr.mxu0 0.0
        %565 = vmatpush1.msra.mxu0 0.0
        %566 = vmatprep.subr.mxu0 0.0
        %567 = vmatpush1.msra.mxu0 0.0
        %568 = vmatprep.subr.mxu0 0.0
        %569 = vmatpush1.msra.mxu0 0.0
        %570 = vmatprep.subr.mxu0 0.0
        %571 = vmatpush1.msra.mxu0 0.0
        %572 = vmatprep.subr.mxu0 0.0
        %573 = vmatpush1.msra.mxu0 0.0
        %574 = vmatprep.subr.mxu0 0.0
        %575 = vmatpush1.msra.mxu0 0.0
        %576 = vmatprep.subr.mxu0 0.0
        %577 = vmatpush1.msra.mxu0 0.0
        %578 = vmatprep.subr.mxu0 0.0
        %579 = vmatpush1.msra.mxu0 0.0
        %580 = vmatprep.subr.mxu0 0.0
        %581 = vmatpush1.msra.mxu0 0.0
        %582 = vmatprep.subr.mxu0 0.0
        %583 = vmatpush1.msra.mxu0 0.0
        %584 = vmatprep.subr.mxu0 0.0
        %585 = vmatpush1.msra.mxu0 0.0
        %586 = vmatprep.subr.mxu0 0.0
        %587 = vmatpush1.msra.mxu0 0.0
        %588 = vmatprep.subr.mxu0 0.0
        %589 = vmatpush1.msra.mxu0 0.0
        %590 = vmatprep.subr.mxu0 0.0
        %591 = vmatpush1.msra.mxu0 0.0
        %592 = vmatprep.subr.mxu0 0.0
        %593 = vmatpush1.msra.mxu0 0.0
        %594 = vmatprep.subr.mxu0 0.0
        %595 = vmatpush1.msra.mxu0 0.0
        %596 = vmatprep.subr.mxu0 0.0
        %597 = vmatpush1.msra.mxu0 0.0
        %598 = vmatprep.subr.mxu0 0.0
        %599 = vmatpush1.msra.mxu0 0.0
        %600 = vmatprep.subr.mxu0 0.0
        %601 = vmatpush1.msra.mxu0 0.0
        %602 = vmatprep.mubr.f32.mxu0 0.0
        %v603 = vand.u32 %v188, 4294901760
        %604 = vmatmul.mubr.f32.gmra.mrb[0].mxu0 %v603
        %v605 = vpop.f32.mrb[0].mxu0
        %v606 = vadd.f32 %v521, %v605
        %v607 = vpop.f32.mrb[0].mxu0
        %608 = vmatprep.mubr.f32.mxu0 0.0
        %v609 = vand.u32 %v190, 4294901760
        %610 = vmatmul.mubr.f32.gmra.mrb[0].mxu0 %v609
        %v611 = vpop.f32.mrb[0].mxu0
        %v612 = vadd.f32 %v529, %v611
        %v613 = vpop.f32.mrb[0].mxu0
        %614 = vdwg.mxu0
        %615 = vmatprep.subr.mxu0 0.0
        %v616 = vand.u32 %v176, 4294901760
        %617 = vmatpush1.msra.mxu0 %v616
        %618 = vmatprep.subr.mxu0 0.0
        %v619 = vand.u32 %v177, 4294901760
        %620 = vmatpush1.msra.mxu0 %v619
        %621 = vmatprep.subr.mxu0 0.0
        %622 = vmatpush1.msra.mxu0 0.0
        %623 = vmatprep.subr.mxu0 0.0
        %624 = vmatpush1.msra.mxu0 0.0
        %625 = vmatprep.subr.mxu0 0.0
        %626 = vmatpush1.msra.mxu0 0.0
        %627 = vmatprep.subr.mxu0 0.0
        %628 = vmatpush1.msra.mxu0 0.0
        %629 = vmatprep.subr.mxu0 0.0
        %630 = vmatpush1.msra.mxu0 0.0
        %631 = vmatprep.subr.mxu0 0.0
        %632 = vmatpush1.msra.mxu0 0.0
        %633 = vmatprep.subr.mxu0 0.0
        %634 = vmatpush1.msra.mxu0 0.0
        %635 = vmatprep.subr.mxu0 0.0
        %636 = vmatpush1.msra.mxu0 0.0
        %637 = vmatprep.subr.mxu0 0.0
        %638 = vmatpush1.msra.mxu0 0.0
        %639 = vmatprep.subr.mxu0 0.0
        %640 = vmatpush1.msra.mxu0 0.0
        %641 = vmatprep.subr.mxu0 0.0
        %642 = vmatpush1.msra.mxu0 0.0
        %643 = vmatprep.subr.mxu0 0.0
        %644 = vmatpush1.msra.mxu0 0.0
        %645 = vmatprep.subr.mxu0 0.0
        %646 = vmatpush1.msra.mxu0 0.0
        %647 = vmatprep.subr.mxu0 0.0
        %648 = vmatpush1.msra.mxu0 0.0
        %649 = vmatprep.subr.mxu0 0.0
        %650 = vmatpush1.msra.mxu0 0.0
        %651 = vmatprep.subr.mxu0 0.0
        %652 = vmatpush1.msra.mxu0 0.0
        %653 = vmatprep.subr.mxu0 0.0
        %654 = vmatpush1.msra.mxu0 0.0
        %655 = vmatprep.subr.mxu0 0.0
        %656 = vmatpush1.msra.mxu0 0.0
        %657 = vmatprep.subr.mxu0 0.0
        %658 = vmatpush1.msra.mxu0 0.0
        %659 = vmatprep.subr.mxu0 0.0
        %660 = vmatpush1.msra.mxu0 0.0
        %661 = vmatprep.subr.mxu0 0.0
        %662 = vmatpush1.msra.mxu0 0.0
        %663 = vmatprep.subr.mxu0 0.0
        %664 = vmatpush1.msra.mxu0 0.0
        %665 = vmatprep.subr.mxu0 0.0
        %666 = vmatpush1.msra.mxu0 0.0
        %667 = vmatprep.subr.mxu0 0.0
        %668 = vmatpush1.msra.mxu0 0.0
        %669 = vmatprep.subr.mxu0 0.0
        %670 = vmatpush1.msra.mxu0 0.0
        %671 = vmatprep.subr.mxu0 0.0
        %672 = vmatpush1.msra.mxu0 0.0
        %673 = vmatprep.subr.mxu0 0.0
        %674 = vmatpush1.msra.mxu0 0.0
        %675 = vmatprep.subr.mxu0 0.0
        %676 = vmatpush1.msra.mxu0 0.0
        %677 = vmatprep.subr.mxu0 0.0
        %678 = vmatpush1.msra.mxu0 0.0
        %679 = vmatprep.subr.mxu0 0.0
        %680 = vmatpush1.msra.mxu0 0.0
        %681 = vmatprep.mubr.f32.mxu0 0.0
        %v682 = vand.u32 %v188, 4294901760
        %683 = vmatmul.mubr.f32.gmra.mrb[0].mxu0 %v682
        %v684 = vpop.f32.mrb[0].mxu0
        %v685 = vadd.f32 %v606, %v684
        %v686 = vpop.f32.mrb[0].mxu0
        %687 = vmatprep.mubr.f32.mxu0 0.0
        %v688 = vand.u32 %v190, 4294901760
        %689 = vmatmul.mubr.f32.gmra.mrb[0].mxu0 %v688
        %v690 = vpop.f32.mrb[0].mxu0
        %v691 = vadd.f32 %v612, %v690
        %v692 = vpop.f32.mrb[0].mxu0
        %693 = vdwg.mxu0
        %v694 = vsel %vm187, %v170, 0
        %v696 = vsel %vm187, %v171, 0
        %698 = vmatprep.subr.mxu0 0.0
        %v699 = vand.u32 %v173, 4294901760
        %700 = vmatpush1.msra.mxu0 %v699
        %701 = vmatprep.subr.mxu0 0.0
        %v702 = vand.u32 %v174, 4294901760
        %703 = vmatpush1.msra.mxu0 %v702
        %704 = vmatprep.subr.mxu0 0.0
        %705 = vmatpush1.msra.mxu0 0.0
        %706 = vmatprep.subr.mxu0 0.0
        %707 = vmatpush1.msra.mxu0 0.0
        %708 = vmatprep.subr.mxu0 0.0
        %709 = vmatpush1.msra.mxu0 0.0
        %710 = vmatprep.subr.mxu0 0.0
        %711 = vmatpush1.msra.mxu0 0.0
        %712 = vmatprep.subr.mxu0 0.0
        %713 = vmatpush1.msra.mxu0 0.0
        %714 = vmatprep.subr.mxu0 0.0
        %715 = vmatpush1.msra.mxu0 0.0
        %716 = vmatprep.subr.mxu0 0.0
        %717 = vmatpush1.msra.mxu0 0.0
        %718 = vmatprep.subr.mxu0 0.0
        %719 = vmatpush1.msra.mxu0 0.0
        %720 = vmatprep.subr.mxu0 0.0
        %721 = vmatpush1.msra.mxu0 0.0
        %722 = vmatprep.subr.mxu0 0.0
        %723 = vmatpush1.msra.mxu0 0.0
        %724 = vmatprep.subr.mxu0 0.0
        %725 = vmatpush1.msra.mxu0 0.0
        %726 = vmatprep.subr.mxu0 0.0
        %727 = vmatpush1.msra.mxu0 0.0
        %728 = vmatprep.subr.mxu0 0.0
        %729 = vmatpush1.msra.mxu0 0.0
        %730 = vmatprep.subr.mxu0 0.0
        %731 = vmatpush1.msra.mxu0 0.0
        %732 = vmatprep.subr.mxu0 0.0
        %733 = vmatpush1.msra.mxu0 0.0
        %734 = vmatprep.subr.mxu0 0.0
        %735 = vmatpush1.msra.mxu0 0.0
        %736 = vmatprep.subr.mxu0 0.0
        %737 = vmatpush1.msra.mxu0 0.0
        %738 = vmatprep.subr.mxu0 0.0
        %739 = vmatpush1.msra.mxu0 0.0
        %740 = vmatprep.subr.mxu0 0.0
        %741 = vmatpush1.msra.mxu0 0.0
        %742 = vmatprep.subr.mxu0 0.0
        %743 = vmatpush1.msra.mxu0 0.0
        %744 = vmatprep.subr.mxu0 0.0
        %745 = vmatpush1.msra.mxu0 0.0
        %746 = vmatprep.subr.mxu0 0.0
        %747 = vmatpush1.msra.mxu0 0.0
        %748 = vmatprep.subr.mxu0 0.0
        %749 = vmatpush1.msra.mxu0 0.0
        %750 = vmatprep.subr.mxu0 0.0
        %751 = vmatpush1.msra.mxu0 0.0
        %752 = vmatprep.subr.mxu0 0.0
        %753 = vmatpush1.msra.mxu0 0.0
        %754 = vmatprep.subr.mxu0 0.0
        %755 = vmatpush1.msra.mxu0 0.0
        %756 = vmatprep.subr.mxu0 0.0
        %757 = vmatpush1.msra.mxu0 0.0
        %758 = vmatprep.subr.mxu0 0.0
        %759 = vmatpush1.msra.mxu0 0.0
        %760 = vmatprep.subr.mxu0 0.0
        %761 = vmatpush1.msra.mxu0 0.0
        %762 = vmatprep.subr.mxu0 0.0
        %763 = vmatpush1.msra.mxu0 0.0
        %764 = vmatprep.mubr.f32.mxu0 0.0
        %v765 = vand.u32 %v694, 4294901760
        %v766 = vsub.f32 %v694, %v765
        %v767 = vand.u32 %v766, 4294901760
        %v768 = vsub.f32 %v766, %v767
        %v769 = vand.u32 %v768, 4294901760
        %770 = vmatmul.mubr.f32.gmra.mrb[0].mxu0 %v769
        %v771 = vpop.f32.mrb[0].mxu0
        %v772 = vadd.f32 %v685, %v771
        %v773 = vpop.f32.mrb[0].mxu0
        %774 = vmatprep.mubr.f32.mxu0 0.0
        %v775 = vand.u32 %v696, 4294901760
        %v776 = vsub.f32 %v696, %v775
        %v777 = vand.u32 %v776, 4294901760
        %v778 = vsub.f32 %v776, %v777
        %v779 = vand.u32 %v778, 4294901760
        %780 = vmatmul.mubr.f32.gmra.mrb[0].mxu0 %v779
        %v781 = vpop.f32.mrb[0].mxu0
        %v782 = vadd.f32 %v691, %v781
        %v783 = vpop.f32.mrb[0].mxu0
        %784 = vdwg.mxu0
        %785 = vmatprep.subr.mxu0 0.0
        %v786 = vand.u32 %v173, 4294901760
        %v787 = vsub.f32 %v173, %v786
        %v788 = vand.u32 %v787, 4294901760
        %v789 = vsub.f32 %v787, %v788
        %v790 = vand.u32 %v789, 4294901760
        %791 = vmatpush1.msra.mxu0 %v790
        %792 = vmatprep.subr.mxu0 0.0
        %v793 = vand.u32 %v174, 4294901760
        %v794 = vsub.f32 %v174, %v793
        %v795 = vand.u32 %v794, 4294901760
        %v796 = vsub.f32 %v794, %v795
        %v797 = vand.u32 %v796, 4294901760
        %798 = vmatpush1.msra.mxu0 %v797
        %799 = vmatprep.subr.mxu0 0.0
        %800 = vmatpush1.msra.mxu0 0.0
        %801 = vmatprep.subr.mxu0 0.0
        %802 = vmatpush1.msra.mxu0 0.0
        %803 = vmatprep.subr.mxu0 0.0
        %804 = vmatpush1.msra.mxu0 0.0
        %805 = vmatprep.subr.mxu0 0.0
        %806 = vmatpush1.msra.mxu0 0.0
        %807 = vmatprep.subr.mxu0 0.0
        %808 = vmatpush1.msra.mxu0 0.0
        %809 = vmatprep.subr.mxu0 0.0
        %810 = vmatpush1.msra.mxu0 0.0
        %811 = vmatprep.subr.mxu0 0.0
        %812 = vmatpush1.msra.mxu0 0.0
        %813 = vmatprep.subr.mxu0 0.0
        %814 = vmatpush1.msra.mxu0 0.0
        %815 = vmatprep.subr.mxu0 0.0
        %816 = vmatpush1.msra.mxu0 0.0
        %817 = vmatprep.subr.mxu0 0.0
        %818 = vmatpush1.msra.mxu0 0.0
        %819 = vmatprep.subr.mxu0 0.0
        %820 = vmatpush1.msra.mxu0 0.0
        %821 = vmatprep.subr.mxu0 0.0
        %822 = vmatpush1.msra.mxu0 0.0
        %823 = vmatprep.subr.mxu0 0.0
        %824 = vmatpush1.msra.mxu0 0.0
        %825 = vmatprep.subr.mxu0 0.0
        %826 = vmatpush1.msra.mxu0 0.0
        %827 = vmatprep.subr.mxu0 0.0
        %828 = vmatpush1.msra.mxu0 0.0
        %829 = vmatprep.subr.mxu0 0.0
        %830 = vmatpush1.msra.mxu0 0.0
        %831 = vmatprep.subr.mxu0 0.0
        %832 = vmatpush1.msra.mxu0 0.0
        %833 = vmatprep.subr.mxu0 0.0
        %834 = vmatpush1.msra.mxu0 0.0
        %835 = vmatprep.subr.mxu0 0.0
        %836 = vmatpush1.msra.mxu0 0.0
        %837 = vmatprep.subr.mxu0 0.0
        %838 = vmatpush1.msra.mxu0 0.0
        %839 = vmatprep.subr.mxu0 0.0
        %840 = vmatpush1.msra.mxu0 0.0
        %841 = vmatprep.subr.mxu0 0.0
        %842 = vmatpush1.msra.mxu0 0.0
        %843 = vmatprep.subr.mxu0 0.0
        %844 = vmatpush1.msra.mxu0 0.0
        %845 = vmatprep.subr.mxu0 0.0
        %846 = vmatpush1.msra.mxu0 0.0
        %847 = vmatprep.subr.mxu0 0.0
        %848 = vmatpush1.msra.mxu0 0.0
        %849 = vmatprep.subr.mxu0 0.0
        %850 = vmatpush1.msra.mxu0 0.0
        %851 = vmatprep.subr.mxu0 0.0
        %852 = vmatpush1.msra.mxu0 0.0
        %853 = vmatprep.subr.mxu0 0.0
        %854 = vmatpush1.msra.mxu0 0.0
        %855 = vmatprep.subr.mxu0 0.0
        %856 = vmatpush1.msra.mxu0 0.0
        %857 = vmatprep.subr.mxu0 0.0
        %858 = vmatpush1.msra.mxu0 0.0
        %859 = vmatprep.mubr.f32.mxu0 0.0
        %v860 = vand.u32 %v694, 4294901760
        %861 = vmatmul.mubr.f32.gmra.mrb[0].mxu0 %v860
        %v862 = vpop.f32.mrb[0].mxu0
        %v863 = vadd.f32 %v772, %v862
        %v864 = vpop.f32.mrb[0].mxu0
        %865 = vmatprep.mubr.f32.mxu0 0.0
        %v866 = vand.u32 %v696, 4294901760
        %867 = vmatmul.mubr.f32.gmra.mrb[0].mxu0 %v866
        %v868 = vpop.f32.mrb[0].mxu0
        %v869 = vadd.f32 %v782, %v868
        %v870 = vpop.f32.mrb[0].mxu0
        %871 = vdwg.mxu0
        %872 = vmatprep.subr.mxu0 0.0
        %v873 = vand.u32 %v173, 4294901760
        %v874 = vsub.f32 %v173, %v873
        %875 = vmatpush1.msra.mxu0 %v874
        %876 = vmatprep.subr.mxu0 0.0
        %v877 = vand.u32 %v174, 4294901760
        %v878 = vsub.f32 %v174, %v877
        %879 = vmatpush1.msra.mxu0 %v878
        %880 = vmatprep.subr.mxu0 0.0
        %881 = vmatpush1.msra.mxu0 0.0
        %882 = vmatprep.subr.mxu0 0.0
        %883 = vmatpush1.msra.mxu0 0.0
        %884 = vmatprep.subr.mxu0 0.0
        %885 = vmatpush1.msra.mxu0 0.0
        %886 = vmatprep.subr.mxu0 0.0
        %887 = vmatpush1.msra.mxu0 0.0
        %888 = vmatprep.subr.mxu0 0.0
        %889 = vmatpush1.msra.mxu0 0.0
        %890 = vmatprep.subr.mxu0 0.0
        %891 = vmatpush1.msra.mxu0 0.0
        %892 = vmatprep.subr.mxu0 0.0
        %893 = vmatpush1.msra.mxu0 0.0
        %894 = vmatprep.subr.mxu0 0.0
        %895 = vmatpush1.msra.mxu0 0.0
        %896 = vmatprep.subr.mxu0 0.0
        %897 = vmatpush1.msra.mxu0 0.0
        %898 = vmatprep.subr.mxu0 0.0
        %899 = vmatpush1.msra.mxu0 0.0
        %900 = vmatprep.subr.mxu0 0.0
        %901 = vmatpush1.msra.mxu0 0.0
        %902 = vmatprep.subr.mxu0 0.0
        %903 = vmatpush1.msra.mxu0 0.0
        %904 = vmatprep.subr.mxu0 0.0
        %905 = vmatpush1.msra.mxu0 0.0
        %906 = vmatprep.subr.mxu0 0.0
        %907 = vmatpush1.msra.mxu0 0.0
        %908 = vmatprep.subr.mxu0 0.0
        %909 = vmatpush1.msra.mxu0 0.0
        %910 = vmatprep.subr.mxu0 0.0
        %911 = vmatpush1.msra.mxu0 0.0
        %912 = vmatprep.subr.mxu0 0.0
        %913 = vmatpush1.msra.mxu0 0.0
        %914 = vmatprep.subr.mxu0 0.0
        %915 = vmatpush1.msra.mxu0 0.0
        %916 = vmatprep.subr.mxu0 0.0
        %917 = vmatpush1.msra.mxu0 0.0
        %918 = vmatprep.subr.mxu0 0.0
        %919 = vmatpush1.msra.mxu0 0.0
        %920 = vmatprep.subr.mxu0 0.0
        %921 = vmatpush1.msra.mxu0 0.0
        %922 = vmatprep.subr.mxu0 0.0
        %923 = vmatpush1.msra.mxu0 0.0
        %924 = vmatprep.subr.mxu0 0.0
        %925 = vmatpush1.msra.mxu0 0.0
        %926 = vmatprep.subr.mxu0 0.0
        %927 = vmatpush1.msra.mxu0 0.0
        %928 = vmatprep.subr.mxu0 0.0
        %929 = vmatpush1.msra.mxu0 0.0
        %930 = vmatprep.subr.mxu0 0.0
        %931 = vmatpush1.msra.mxu0 0.0
        %932 = vmatprep.subr.mxu0 0.0
        %933 = vmatpush1.msra.mxu0 0.0
        %934 = vmatprep.subr.mxu0 0.0
        %935 = vmatpush1.msra.mxu0 0.0
        %936 = vmatprep.subr.mxu0 0.0
        %937 = vmatpush1.msra.mxu0 0.0
        %938 = vmatprep.subr.mxu0 0.0
        %939 = vmatpush1.msra.mxu0 0.0
        %940 = vmatprep.mubr.f32.mxu0 0.0
        %v941 = vand.u32 %v694, 4294901760
        %v942 = vsub.f32 %v694, %v941
        %943 = vmatmul.mubr.f32.gmra.mrb[0].mxu0 %v942
        %v944 = vpop.f32.mrb[0].mxu0
        %v945 = vadd.f32 %v863, %v944
        %v946 = vpop.f32.mrb[0].mxu0
        %947 = vmatprep.mubr.f32.mxu0 0.0
        %v948 = vand.u32 %v696, 4294901760
        %v949 = vsub.f32 %v696, %v948
        %950 = vmatmul.mubr.f32.gmra.mrb[0].mxu0 %v949
        %v951 = vpop.f32.mrb[0].mxu0
        %v952 = vadd.f32 %v869, %v951
        %v953 = vpop.f32.mrb[0].mxu0
        %954 = vdwg.mxu0
        %955 = vmatprep.subr.mxu0 0.0
        %v956 = vand.u32 %v173, 4294901760
        %957 = vmatpush1.msra.mxu0 %v956
        %958 = vmatprep.subr.mxu0 0.0
        %v959 = vand.u32 %v174, 4294901760
        %960 = vmatpush1.msra.mxu0 %v959
        %961 = vmatprep.subr.mxu0 0.0
        %962 = vmatpush1.msra.mxu0 0.0
        %963 = vmatprep.subr.mxu0 0.0
        %964 = vmatpush1.msra.mxu0 0.0
        %965 = vmatprep.subr.mxu0 0.0
        %966 = vmatpush1.msra.mxu0 0.0
        %967 = vmatprep.subr.mxu0 0.0
        %968 = vmatpush1.msra.mxu0 0.0
        %969 = vmatprep.subr.mxu0 0.0
        %970 = vmatpush1.msra.mxu0 0.0
        %971 = vmatprep.subr.mxu0 0.0
        %972 = vmatpush1.msra.mxu0 0.0
        %973 = vmatprep.subr.mxu0 0.0
        %974 = vmatpush1.msra.mxu0 0.0
        %975 = vmatprep.subr.mxu0 0.0
        %976 = vmatpush1.msra.mxu0 0.0
        %977 = vmatprep.subr.mxu0 0.0
        %978 = vmatpush1.msra.mxu0 0.0
        %979 = vmatprep.subr.mxu0 0.0
        %980 = vmatpush1.msra.mxu0 0.0
        %981 = vmatprep.subr.mxu0 0.0
        %982 = vmatpush1.msra.mxu0 0.0
        %983 = vmatprep.subr.mxu0 0.0
        %984 = vmatpush1.msra.mxu0 0.0
        %985 = vmatprep.subr.mxu0 0.0
        %986 = vmatpush1.msra.mxu0 0.0
        %987 = vmatprep.subr.mxu0 0.0
        %988 = vmatpush1.msra.mxu0 0.0
        %989 = vmatprep.subr.mxu0 0.0
        %990 = vmatpush1.msra.mxu0 0.0
        %991 = vmatprep.subr.mxu0 0.0
        %992 = vmatpush1.msra.mxu0 0.0
        %993 = vmatprep.subr.mxu0 0.0
        %994 = vmatpush1.msra.mxu0 0.0
        %995 = vmatprep.subr.mxu0 0.0
        %996 = vmatpush1.msra.mxu0 0.0
        %997 = vmatprep.subr.mxu0 0.0
        %998 = vmatpush1.msra.mxu0 0.0
        %999 = vmatprep.subr.mxu0 0.0
        %1000 = vmatpush1.msra.mxu0 0.0
        %1001 = vmatprep.subr.mxu0 0.0
        %1002 = vmatpush1.msra.mxu0 0.0
        %1003 = vmatprep.subr.mxu0 0.0
        %1004 = vmatpush1.msra.mxu0 0.0
        %1005 = vmatprep.subr.mxu0 0.0
        %1006 = vmatpush1.msra.mxu0 0.0
        %1007 = vmatprep.subr.mxu0 0.0
        %1008 = vmatpush1.msra.mxu0 0.0
        %1009 = vmatprep.subr.mxu0 0.0
        %1010 = vmatpush1.msra.mxu0 0.0
        %1011 = vmatprep.subr.mxu0 0.0
        %1012 = vmatpush1.msra.mxu0 0.0
        %1013 = vmatprep.subr.mxu0 0.0
        %1014 = vmatpush1.msra.mxu0 0.0
        %1015 = vmatprep.subr.mxu0 0.0
        %1016 = vmatpush1.msra.mxu0 0.0
        %1017 = vmatprep.subr.mxu0 0.0
        %1018 = vmatpush1.msra.mxu0 0.0
        %1019 = vmatprep.subr.mxu0 0.0
        %1020 = vmatpush1.msra.mxu0 0.0
        %1021 = vmatprep.mubr.f32.mxu0 0.0
        %v1022 = vand.u32 %v694, 4294901760
        %v1023 = vsub.f32 %v694, %v1022
        %v1024 = vand.u32 %v1023, 4294901760
        %1025 = vmatmul.mubr.f32.gmra.mrb[0].mxu0 %v1024
        %v1026 = vpop.f32.mrb[0].mxu0
        %v1027 = vadd.f32 %v945, %v1026
        %v1028 = vpop.f32.mrb[0].mxu0
        %1029 = vmatprep.mubr.f32.mxu0 0.0
        %v1030 = vand.u32 %v696, 4294901760
        %v1031 = vsub.f32 %v696, %v1030
        %v1032 = vand.u32 %v1031, 4294901760
        %1033 = vmatmul.mubr.f32.gmra.mrb[0].mxu0 %v1032
        %v1034 = vpop.f32.mrb[0].mxu0
        %v1035 = vadd.f32 %v952, %v1034
        %v1036 = vpop.f32.mrb[0].mxu0
        %1037 = vdwg.mxu0
        %1038 = vmatprep.subr.mxu0 0.0
        %v1039 = vand.u32 %v173, 4294901760
        %v1040 = vsub.f32 %v173, %v1039
        %v1041 = vand.u32 %v1040, 4294901760
        %1042 = vmatpush1.msra.mxu0 %v1041
        %1043 = vmatprep.subr.mxu0 0.0
        %v1044 = vand.u32 %v174, 4294901760
        %v1045 = vsub.f32 %v174, %v1044
        %v1046 = vand.u32 %v1045, 4294901760
        %1047 = vmatpush1.msra.mxu0 %v1046
        %1048 = vmatprep.subr.mxu0 0.0
        %1049 = vmatpush1.msra.mxu0 0.0
        %1050 = vmatprep.subr.mxu0 0.0
        %1051 = vmatpush1.msra.mxu0 0.0
        %1052 = vmatprep.subr.mxu0 0.0
        %1053 = vmatpush1.msra.mxu0 0.0
        %1054 = vmatprep.subr.mxu0 0.0
        %1055 = vmatpush1.msra.mxu0 0.0
        %1056 = vmatprep.subr.mxu0 0.0
        %1057 = vmatpush1.msra.mxu0 0.0
        %1058 = vmatprep.subr.mxu0 0.0
        %1059 = vmatpush1.msra.mxu0 0.0
        %1060 = vmatprep.subr.mxu0 0.0
        %1061 = vmatpush1.msra.mxu0 0.0
        %1062 = vmatprep.subr.mxu0 0.0
        %1063 = vmatpush1.msra.mxu0 0.0
        %1064 = vmatprep.subr.mxu0 0.0
        %1065 = vmatpush1.msra.mxu0 0.0
        %1066 = vmatprep.subr.mxu0 0.0
        %1067 = vmatpush1.msra.mxu0 0.0
        %1068 = vmatprep.subr.mxu0 0.0
        %1069 = vmatpush1.msra.mxu0 0.0
        %1070 = vmatprep.subr.mxu0 0.0
        %1071 = vmatpush1.msra.mxu0 0.0
        %1072 = vmatprep.subr.mxu0 0.0
        %1073 = vmatpush1.msra.mxu0 0.0
        %1074 = vmatprep.subr.mxu0 0.0
        %1075 = vmatpush1.msra.mxu0 0.0
        %1076 = vmatprep.subr.mxu0 0.0
        %1077 = vmatpush1.msra.mxu0 0.0
        %1078 = vmatprep.subr.mxu0 0.0
        %1079 = vmatpush1.msra.mxu0 0.0
        %1080 = vmatprep.subr.mxu0 0.0
        %1081 = vmatpush1.msra.mxu0 0.0
        %1082 = vmatprep.subr.mxu0 0.0
        %1083 = vmatpush1.msra.mxu0 0.0
        %1084 = vmatprep.subr.mxu0 0.0
        %1085 = vmatpush1.msra.mxu0 0.0
        %1086 = vmatprep.subr.mxu0 0.0
        %1087 = vmatpush1.msra.mxu0 0.0
        %1088 = vmatprep.subr.mxu0 0.0
        %1089 = vmatpush1.msra.mxu0 0.0
        %1090 = vmatprep.subr.mxu0 0.0
        %1091 = vmatpush1.msra.mxu0 0.0
        %1092 = vmatprep.subr.mxu0 0.0
        %1093 = vmatpush1.msra.mxu0 0.0
        %1094 = vmatprep.subr.mxu0 0.0
        %1095 = vmatpush1.msra.mxu0 0.0
        %1096 = vmatprep.subr.mxu0 0.0
        %1097 = vmatpush1.msra.mxu0 0.0
        %1098 = vmatprep.subr.mxu0 0.0
        %1099 = vmatpush1.msra.mxu0 0.0
        %1100 = vmatprep.subr.mxu0 0.0
        %1101 = vmatpush1.msra.mxu0 0.0
        %1102 = vmatprep.subr.mxu0 0.0
        %1103 = vmatpush1.msra.mxu0 0.0
        %1104 = vmatprep.subr.mxu0 0.0
        %1105 = vmatpush1.msra.mxu0 0.0
        %1106 = vmatprep.subr.mxu0 0.0
        %1107 = vmatpush1.msra.mxu0 0.0
        %1108 = vmatprep.mubr.f32.mxu0 0.0
        %v1109 = vand.u32 %v694, 4294901760
        %1110 = vmatmul.mubr.f32.gmra.mrb[0].mxu0 %v1109
        %v1111 = vpop.f32.mrb[0].mxu0
        %v1112 = vadd.f32 %v1027, %v1111
        %v1113 = vpop.f32.mrb[0].mxu0
        %1114 = vmatprep.mubr.f32.mxu0 0.0
        %v1115 = vand.u32 %v696, 4294901760
        %1116 = vmatmul.mubr.f32.gmra.mrb[0].mxu0 %v1115
        %v1117 = vpop.f32.mrb[0].mxu0
        %v1118 = vadd.f32 %v1035, %v1117
        %v1119 = vpop.f32.mrb[0].mxu0
        %1120 = vdwg.mxu0
        %1121 = vmatprep.subr.mxu0 0.0
        %v1122 = vand.u32 %v173, 4294901760
        %1123 = vmatpush1.msra.mxu0 %v1122
        %1124 = vmatprep.subr.mxu0 0.0
        %v1125 = vand.u32 %v174, 4294901760
        %1126 = vmatpush1.msra.mxu0 %v1125
        %1127 = vmatprep.subr.mxu0 0.0
        %1128 = vmatpush1.msra.mxu0 0.0
        %1129 = vmatprep.subr.mxu0 0.0
        %1130 = vmatpush1.msra.mxu0 0.0
        %1131 = vmatprep.subr.mxu0 0.0
        %1132 = vmatpush1.msra.mxu0 0.0
        %1133 = vmatprep.subr.mxu0 0.0
        %1134 = vmatpush1.msra.mxu0 0.0
        %1135 = vmatprep.subr.mxu0 0.0
        %1136 = vmatpush1.msra.mxu0 0.0
        %1137 = vmatprep.subr.mxu0 0.0
        %1138 = vmatpush1.msra.mxu0 0.0
        %1139 = vmatprep.subr.mxu0 0.0
        %1140 = vmatpush1.msra.mxu0 0.0
        %1141 = vmatprep.subr.mxu0 0.0
        %1142 = vmatpush1.msra.mxu0 0.0
        %1143 = vmatprep.subr.mxu0 0.0
        %1144 = vmatpush1.msra.mxu0 0.0
        %1145 = vmatprep.subr.mxu0 0.0
        %1146 = vmatpush1.msra.mxu0 0.0
        %1147 = vmatprep.subr.mxu0 0.0
        %1148 = vmatpush1.msra.mxu0 0.0
        %1149 = vmatprep.subr.mxu0 0.0
        %1150 = vmatpush1.msra.mxu0 0.0
        %1151 = vmatprep.subr.mxu0 0.0
        %1152 = vmatpush1.msra.mxu0 0.0
        %1153 = vmatprep.subr.mxu0 0.0
        %1154 = vmatpush1.msra.mxu0 0.0
        %1155 = vmatprep.subr.mxu0 0.0
        %1156 = vmatpush1.msra.mxu0 0.0
        %1157 = vmatprep.subr.mxu0 0.0
        %1158 = vmatpush1.msra.mxu0 0.0
        %1159 = vmatprep.subr.mxu0 0.0
        %1160 = vmatpush1.msra.mxu0 0.0
        %1161 = vmatprep.subr.mxu0 0.0
        %1162 = vmatpush1.msra.mxu0 0.0
        %1163 = vmatprep.subr.mxu0 0.0
        %1164 = vmatpush1.msra.mxu0 0.0
        %1165 = vmatprep.subr.mxu0 0.0
        %1166 = vmatpush1.msra.mxu0 0.0
        %1167 = vmatprep.subr.mxu0 0.0
        %1168 = vmatpush1.msra.mxu0 0.0
        %1169 = vmatprep.subr.mxu0 0.0
        %1170 = vmatpush1.msra.mxu0 0.0
        %1171 = vmatprep.subr.mxu0 0.0
        %1172 = vmatpush1.msra.mxu0 0.0
        %1173 = vmatprep.subr.mxu0 0.0
        %1174 = vmatpush1.msra.mxu0 0.0
        %1175 = vmatprep.subr.mxu0 0.0
        %1176 = vmatpush1.msra.mxu0 0.0
        %1177 = vmatprep.subr.mxu0 0.0
        %1178 = vmatpush1.msra.mxu0 0.0
        %1179 = vmatprep.subr.mxu0 0.0
        %1180 = vmatpush1.msra.mxu0 0.0
        %1181 = vmatprep.subr.mxu0 0.0
        %1182 = vmatpush1.msra.mxu0 0.0
        %1183 = vmatprep.subr.mxu0 0.0
        %1184 = vmatpush1.msra.mxu0 0.0
        %1185 = vmatprep.subr.mxu0 0.0
        %1186 = vmatpush1.msra.mxu0 0.0
        %1187 = vmatprep.mubr.f32.mxu0 0.0
        %v1188 = vand.u32 %v694, 4294901760
        %1189 = vmatmul.mubr.f32.gmra.mrb[0].mxu0 %v1188
        %v1190 = vpop.f32.mrb[0].mxu0
        %v1191 = vadd.f32 %v1112, %v1190
        %v1192 = vpop.f32.mrb[0].mxu0
        %1193 = vmatprep.mubr.f32.mxu0 0.0
        %v1194 = vand.u32 %v696, 4294901760
        %1195 = vmatmul.mubr.f32.gmra.mrb[0].mxu0 %v1194
        %v1196 = vpop.f32.mrb[0].mxu0
        %v1197 = vadd.f32 %v1118, %v1196
        %v1198 = vpop.f32.mrb[0].mxu0
        %1199 = vdwg.mxu0
        %s1200 = scalar_lea.vmem %s1, 32
        %v1201 = vld [vmem:[%s1200] sm:$0xff]
        %v1202 = vld [vmem:[%s1200 + $0x8] sm:$0xff]
        %vm1203 = vcmask 1045504
        %v1204 = vrot.slane %v170, 2
        %v1205 = vrot.slane %v171, 2
        %v1206 = vsel %vm1203, %v1204, %v1205
        %v1207 = vrot.slane %v172, 2
        %v1208 = vsel %vm1203, %v1205, %v1207
        %v1209 = vsel %vm187, %v1206, 0
        %v1211 = vsel %vm187, %v1208, 0
        %1213 = vmatprep.subr.mxu0 0.0
        %v1214 = vand.u32 %v1201, 4294901760
        %1215 = vmatpush1.msra.mxu0 %v1214
        %1216 = vmatprep.subr.mxu0 0.0
        %v1217 = vand.u32 %v1202, 4294901760
        %1218 = vmatpush1.msra.mxu0 %v1217
        %1219 = vmatprep.subr.mxu0 0.0
        %1220 = vmatpush1.msra.mxu0 0.0
        %1221 = vmatprep.subr.mxu0 0.0
        %1222 = vmatpush1.msra.mxu0 0.0
        %1223 = vmatprep.subr.mxu0 0.0
        %1224 = vmatpush1.msra.mxu0 0.0
        %1225 = vmatprep.subr.mxu0 0.0
        %1226 = vmatpush1.msra.mxu0 0.0
        %1227 = vmatprep.subr.mxu0 0.0
        %1228 = vmatpush1.msra.mxu0 0.0
        %1229 = vmatprep.subr.mxu0 0.0
        %1230 = vmatpush1.msra.mxu0 0.0
        %1231 = vmatprep.subr.mxu0 0.0
        %1232 = vmatpush1.msra.mxu0 0.0
        %1233 = vmatprep.subr.mxu0 0.0
        %1234 = vmatpush1.msra.mxu0 0.0
        %1235 = vmatprep.subr.mxu0 0.0
        %1236 = vmatpush1.msra.mxu0 0.0
        %1237 = vmatprep.subr.mxu0 0.0
        %1238 = vmatpush1.msra.mxu0 0.0
        %1239 = vmatprep.subr.mxu0 0.0
        %1240 = vmatpush1.msra.mxu0 0.0
        %1241 = vmatprep.subr.mxu0 0.0
        %1242 = vmatpush1.msra.mxu0 0.0
        %1243 = vmatprep.subr.mxu0 0.0
        %1244 = vmatpush1.msra.mxu0 0.0
        %1245 = vmatprep.subr.mxu0 0.0
        %1246 = vmatpush1.msra.mxu0 0.0
        %1247 = vmatprep.subr.mxu0 0.0
        %1248 = vmatpush1.msra.mxu0 0.0
        %1249 = vmatprep.subr.mxu0 0.0
        %1250 = vmatpush1.msra.mxu0 0.0
        %1251 = vmatprep.subr.mxu0 0.0
        %1252 = vmatpush1.msra.mxu0 0.0
        %1253 = vmatprep.subr.mxu0 0.0
        %1254 = vmatpush1.msra.mxu0 0.0
        %1255 = vmatprep.subr.mxu0 0.0
        %1256 = vmatpush1.msra.mxu0 0.0
        %1257 = vmatprep.subr.mxu0 0.0
        %1258 = vmatpush1.msra.mxu0 0.0
        %1259 = vmatprep.subr.mxu0 0.0
        %1260 = vmatpush1.msra.mxu0 0.0
        %1261 = vmatprep.subr.mxu0 0.0
        %1262 = vmatpush1.msra.mxu0 0.0
        %1263 = vmatprep.subr.mxu0 0.0
        %1264 = vmatpush1.msra.mxu0 0.0
        %1265 = vmatprep.subr.mxu0 0.0
        %1266 = vmatpush1.msra.mxu0 0.0
        %1267 = vmatprep.subr.mxu0 0.0
        %1268 = vmatpush1.msra.mxu0 0.0
        %1269 = vmatprep.subr.mxu0 0.0
        %1270 = vmatpush1.msra.mxu0 0.0
        %1271 = vmatprep.subr.mxu0 0.0
        %1272 = vmatpush1.msra.mxu0 0.0
        %1273 = vmatprep.subr.mxu0 0.0
        %1274 = vmatpush1.msra.mxu0 0.0
        %1275 = vmatprep.subr.mxu0 0.0
        %1276 = vmatpush1.msra.mxu0 0.0
        %1277 = vmatprep.subr.mxu0 0.0
        %1278 = vmatpush1.msra.mxu0 0.0
        %1279 = vmatprep.mubr.f32.mxu0 0.0
        %v1280 = vand.u32 %v1209, 4294901760
        %v1281 = vsub.f32 %v1209, %v1280
        %v1282 = vand.u32 %v1281, 4294901760
        %v1283 = vsub.f32 %v1281, %v1282
        %v1284 = vand.u32 %v1283, 4294901760
        %1285 = vmatmul.mubr.f32.gmra.mrb[0].mxu0 %v1284
        %v1286 = vpop.f32.mrb[0].mxu0
        %v1287 = vadd.f32 0.0, %v1286
        %v1288 = vpop.f32.mrb[0].mxu0
        %1289 = vmatprep.mubr.f32.mxu0 0.0
        %v1290 = vand.u32 %v1211, 4294901760
        %v1291 = vsub.f32 %v1211, %v1290
        %v1292 = vand.u32 %v1291, 4294901760
        %v1293 = vsub.f32 %v1291, %v1292
        %v1294 = vand.u32 %v1293, 4294901760
        %1295 = vmatmul.mubr.f32.gmra.mrb[0].mxu0 %v1294
        %v1296 = vpop.f32.mrb[0].mxu0
        %v1297 = vadd.f32 0.0, %v1296
        %v1298 = vpop.f32.mrb[0].mxu0
        %1299 = vdwg.mxu0
        %1300 = vmatprep.subr.mxu0 0.0
        %v1301 = vand.u32 %v1201, 4294901760
        %v1302 = vsub.f32 %v1201, %v1301
        %v1303 = vand.u32 %v1302, 4294901760
        %v1304 = vsub.f32 %v1302, %v1303
        %v1305 = vand.u32 %v1304, 4294901760
        %1306 = vmatpush1.msra.mxu0 %v1305
        %1307 = vmatprep.subr.mxu0 0.0
        %v1308 = vand.u32 %v1202, 4294901760
        %v1309 = vsub.f32 %v1202, %v1308
        %v1310 = vand.u32 %v1309, 4294901760
        %v1311 = vsub.f32 %v1309, %v1310
        %v1312 = vand.u32 %v1311, 4294901760
        %1313 = vmatpush1.msra.mxu0 %v1312
        %1314 = vmatprep.subr.mxu0 0.0
        %1315 = vmatpush1.msra.mxu0 0.0
        %1316 = vmatprep.subr.mxu0 0.0
        %1317 = vmatpush1.msra.mxu0 0.0
        %1318 = vmatprep.subr.mxu0 0.0
        %1319 = vmatpush1.msra.mxu0 0.0
        %1320 = vmatprep.subr.mxu0 0.0
        %1321 = vmatpush1.msra.mxu0 0.0
        %1322 = vmatprep.subr.mxu0 0.0
        %1323 = vmatpush1.msra.mxu0 0.0
        %1324 = vmatprep.subr.mxu0 0.0
        %1325 = vmatpush1.msra.mxu0 0.0
        %1326 = vmatprep.subr.mxu0 0.0
        %1327 = vmatpush1.msra.mxu0 0.0
        %1328 = vmatprep.subr.mxu0 0.0
        %1329 = vmatpush1.msra.mxu0 0.0
        %1330 = vmatprep.subr.mxu0 0.0
        %1331 = vmatpush1.msra.mxu0 0.0
        %1332 = vmatprep.subr.mxu0 0.0
        %1333 = vmatpush1.msra.mxu0 0.0
        %1334 = vmatprep.subr.mxu0 0.0
        %1335 = vmatpush1.msra.mxu0 0.0
        %1336 = vmatprep.subr.mxu0 0.0
        %1337 = vmatpush1.msra.mxu0 0.0
        %1338 = vmatprep.subr.mxu0 0.0
        %1339 = vmatpush1.msra.mxu0 0.0
        %1340 = vmatprep.subr.mxu0 0.0
        %1341 = vmatpush1.msra.mxu0 0.0
        %1342 = vmatprep.subr.mxu0 0.0
        %1343 = vmatpush1.msra.mxu0 0.0
        %1344 = vmatprep.subr.mxu0 0.0
        %1345 = vmatpush1.msra.mxu0 0.0
        %1346 = vmatprep.subr.mxu0 0.0
        %1347 = vmatpush1.msra.mxu0 0.0
        %1348 = vmatprep.subr.mxu0 0.0
        %1349 = vmatpush1.msra.mxu0 0.0
        %1350 = vmatprep.subr.mxu0 0.0
        %1351 = vmatpush1.msra.mxu0 0.0
        %1352 = vmatprep.subr.mxu0 0.0
        %1353 = vmatpush1.msra.mxu0 0.0
        %1354 = vmatprep.subr.mxu0 0.0
        %1355 = vmatpush1.msra.mxu0 0.0
        %1356 = vmatprep.subr.mxu0 0.0
        %1357 = vmatpush1.msra.mxu0 0.0
        %1358 = vmatprep.subr.mxu0 0.0
        %1359 = vmatpush1.msra.mxu0 0.0
        %1360 = vmatprep.subr.mxu0 0.0
        %1361 = vmatpush1.msra.mxu0 0.0
        %1362 = vmatprep.subr.mxu0 0.0
        %1363 = vmatpush1.msra.mxu0 0.0
        %1364 = vmatprep.subr.mxu0 0.0
        %1365 = vmatpush1.msra.mxu0 0.0
        %1366 = vmatprep.subr.mxu0 0.0
        %1367 = vmatpush1.msra.mxu0 0.0
        %1368 = vmatprep.subr.mxu0 0.0
        %1369 = vmatpush1.msra.mxu0 0.0
        %1370 = vmatprep.subr.mxu0 0.0
        %1371 = vmatpush1.msra.mxu0 0.0
        %1372 = vmatprep.subr.mxu0 0.0
        %1373 = vmatpush1.msra.mxu0 0.0
        %1374 = vmatprep.mubr.f32.mxu0 0.0
        %v1375 = vand.u32 %v1209, 4294901760
        %1376 = vmatmul.mubr.f32.gmra.mrb[0].mxu0 %v1375
        %v1377 = vpop.f32.mrb[0].mxu0
        %v1378 = vadd.f32 %v1287, %v1377
        %v1379 = vpop.f32.mrb[0].mxu0
        %1380 = vmatprep.mubr.f32.mxu0 0.0
        %v1381 = vand.u32 %v1211, 4294901760
        %1382 = vmatmul.mubr.f32.gmra.mrb[0].mxu0 %v1381
        %v1383 = vpop.f32.mrb[0].mxu0
        %v1384 = vadd.f32 %v1297, %v1383
        %v1385 = vpop.f32.mrb[0].mxu0
        %1386 = vdwg.mxu0
        %1387 = vmatprep.subr.mxu0 0.0
        %v1388 = vand.u32 %v1201, 4294901760
        %v1389 = vsub.f32 %v1201, %v1388
        %1390 = vmatpush1.msra.mxu0 %v1389
        %1391 = vmatprep.subr.mxu0 0.0
        %v1392 = vand.u32 %v1202, 4294901760
        %v1393 = vsub.f32 %v1202, %v1392
        %1394 = vmatpush1.msra.mxu0 %v1393
        %1395 = vmatprep.subr.mxu0 0.0
        %1396 = vmatpush1.msra.mxu0 0.0
        %1397 = vmatprep.subr.mxu0 0.0
        %1398 = vmatpush1.msra.mxu0 0.0
        %1399 = vmatprep.subr.mxu0 0.0
        %1400 = vmatpush1.msra.mxu0 0.0
        %1401 = vmatprep.subr.mxu0 0.0
        %1402 = vmatpush1.msra.mxu0 0.0
        %1403 = vmatprep.subr.mxu0 0.0
        %1404 = vmatpush1.msra.mxu0 0.0
        %1405 = vmatprep.subr.mxu0 0.0
        %1406 = vmatpush1.msra.mxu0 0.0
        %1407 = vmatprep.subr.mxu0 0.0
        %1408 = vmatpush1.msra.mxu0 0.0
        %1409 = vmatprep.subr.mxu0 0.0
        %1410 = vmatpush1.msra.mxu0 0.0
        %1411 = vmatprep.subr.mxu0 0.0
        %1412 = vmatpush1.msra.mxu0 0.0
        %1413 = vmatprep.subr.mxu0 0.0
        %1414 = vmatpush1.msra.mxu0 0.0
        %1415 = vmatprep.subr.mxu0 0.0
        %1416 = vmatpush1.msra.mxu0 0.0
        %1417 = vmatprep.subr.mxu0 0.0
        %1418 = vmatpush1.msra.mxu0 0.0
        %1419 = vmatprep.subr.mxu0 0.0
        %1420 = vmatpush1.msra.mxu0 0.0
        %1421 = vmatprep.subr.mxu0 0.0
        %1422 = vmatpush1.msra.mxu0 0.0
        %1423 = vmatprep.subr.mxu0 0.0
        %1424 = vmatpush1.msra.mxu0 0.0
        %1425 = vmatprep.subr.mxu0 0.0
        %1426 = vmatpush1.msra.mxu0 0.0
        %1427 = vmatprep.subr.mxu0 0.0
        %1428 = vmatpush1.msra.mxu0 0.0
        %1429 = vmatprep.subr.mxu0 0.0
        %1430 = vmatpush1.msra.mxu0 0.0
        %1431 = vmatprep.subr.mxu0 0.0
        %1432 = vmatpush1.msra.mxu0 0.0
        %1433 = vmatprep.subr.mxu0 0.0
        %1434 = vmatpush1.msra.mxu0 0.0
        %1435 = vmatprep.subr.mxu0 0.0
        %1436 = vmatpush1.msra.mxu0 0.0
        %1437 = vmatprep.subr.mxu0 0.0
        %1438 = vmatpush1.msra.mxu0 0.0
        %1439 = vmatprep.subr.mxu0 0.0
        %1440 = vmatpush1.msra.mxu0 0.0
        %1441 = vmatprep.subr.mxu0 0.0
        %1442 = vmatpush1.msra.mxu0 0.0
        %1443 = vmatprep.subr.mxu0 0.0
        %1444 = vmatpush1.msra.mxu0 0.0
        %1445 = vmatprep.subr.mxu0 0.0
        %1446 = vmatpush1.msra.mxu0 0.0
        %1447 = vmatprep.subr.mxu0 0.0
        %1448 = vmatpush1.msra.mxu0 0.0
        %1449 = vmatprep.subr.mxu0 0.0
        %1450 = vmatpush1.msra.mxu0 0.0
        %1451 = vmatprep.subr.mxu0 0.0
        %1452 = vmatpush1.msra.mxu0 0.0
        %1453 = vmatprep.subr.mxu0 0.0
        %1454 = vmatpush1.msra.mxu0 0.0
        %1455 = vmatprep.mubr.f32.mxu0 0.0
        %v1456 = vand.u32 %v1209, 4294901760
        %v1457 = vsub.f32 %v1209, %v1456
        %1458 = vmatmul.mubr.f32.gmra.mrb[0].mxu0 %v1457
        %v1459 = vpop.f32.mrb[0].mxu0
        %v1460 = vadd.f32 %v1378, %v1459
        %v1461 = vpop.f32.mrb[0].mxu0
        %1462 = vmatprep.mubr.f32.mxu0 0.0
        %v1463 = vand.u32 %v1211, 4294901760
        %v1464 = vsub.f32 %v1211, %v1463
        %1465 = vmatmul.mubr.f32.gmra.mrb[0].mxu0 %v1464
        %v1466 = vpop.f32.mrb[0].mxu0
        %v1467 = vadd.f32 %v1384, %v1466
        %v1468 = vpop.f32.mrb[0].mxu0
        %1469 = vdwg.mxu0
        %1470 = vmatprep.subr.mxu0 0.0
        %v1471 = vand.u32 %v1201, 4294901760
        %1472 = vmatpush1.msra.mxu0 %v1471
        %1473 = vmatprep.subr.mxu0 0.0
        %v1474 = vand.u32 %v1202, 4294901760
        %1475 = vmatpush1.msra.mxu0 %v1474
        %1476 = vmatprep.subr.mxu0 0.0
        %1477 = vmatpush1.msra.mxu0 0.0
        %1478 = vmatprep.subr.mxu0 0.0
        %1479 = vmatpush1.msra.mxu0 0.0
        %1480 = vmatprep.subr.mxu0 0.0
        %1481 = vmatpush1.msra.mxu0 0.0
        %1482 = vmatprep.subr.mxu0 0.0
        %1483 = vmatpush1.msra.mxu0 0.0
        %1484 = vmatprep.subr.mxu0 0.0
        %1485 = vmatpush1.msra.mxu0 0.0
        %1486 = vmatprep.subr.mxu0 0.0
        %1487 = vmatpush1.msra.mxu0 0.0
        %1488 = vmatprep.subr.mxu0 0.0
        %1489 = vmatpush1.msra.mxu0 0.0
        %1490 = vmatprep.subr.mxu0 0.0
        %1491 = vmatpush1.msra.mxu0 0.0
        %1492 = vmatprep.subr.mxu0 0.0
        %1493 = vmatpush1.msra.mxu0 0.0
        %1494 = vmatprep.subr.mxu0 0.0
        %1495 = vmatpush1.msra.mxu0 0.0
        %1496 = vmatprep.subr.mxu0 0.0
        %1497 = vmatpush1.msra.mxu0 0.0
        %1498 = vmatprep.subr.mxu0 0.0
        %1499 = vmatpush1.msra.mxu0 0.0
        %1500 = vmatprep.subr.mxu0 0.0
        %1501 = vmatpush1.msra.mxu0 0.0
        %1502 = vmatprep.subr.mxu0 0.0
        %1503 = vmatpush1.msra.mxu0 0.0
        %1504 = vmatprep.subr.mxu0 0.0
        %1505 = vmatpush1.msra.mxu0 0.0
        %1506 = vmatprep.subr.mxu0 0.0
        %1507 = vmatpush1.msra.mxu0 0.0
        %1508 = vmatprep.subr.mxu0 0.0
        %1509 = vmatpush1.msra.mxu0 0.0
        %1510 = vmatprep.subr.mxu0 0.0
        %1511 = vmatpush1.msra.mxu0 0.0
        %1512 = vmatprep.subr.mxu0 0.0
        %1513 = vmatpush1.msra.mxu0 0.0
        %1514 = vmatprep.subr.mxu0 0.0
        %1515 = vmatpush1.msra.mxu0 0.0
        %1516 = vmatprep.subr.mxu0 0.0
        %1517 = vmatpush1.msra.mxu0 0.0
        %1518 = vmatprep.subr.mxu0 0.0
        %1519 = vmatpush1.msra.mxu0 0.0
        %1520 = vmatprep.subr.mxu0 0.0
        %1521 = vmatpush1.msra.mxu0 0.0
        %1522 = vmatprep.subr.mxu0 0.0
        %1523 = vmatpush1.msra.mxu0 0.0
        %1524 = vmatprep.subr.mxu0 0.0
        %1525 = vmatpush1.msra.mxu0 0.0
        %1526 = vmatprep.subr.mxu0 0.0
        %1527 = vmatpush1.msra.mxu0 0.0
        %1528 = vmatprep.subr.mxu0 0.0
        %1529 = vmatpush1.msra.mxu0 0.0
        %1530 = vmatprep.subr.mxu0 0.0
        %1531 = vmatpush1.msra.mxu0 0.0
        %1532 = vmatprep.subr.mxu0 0.0
        %1533 = vmatpush1.msra.mxu0 0.0
        %1534 = vmatprep.subr.mxu0 0.0
        %1535 = vmatpush1.msra.mxu0 0.0
        %1536 = vmatprep.mubr.f32.mxu0 0.0
        %v1537 = vand.u32 %v1209, 4294901760
        %v1538 = vsub.f32 %v1209, %v1537
        %v1539 = vand.u32 %v1538, 4294901760
        %1540 = vmatmul.mubr.f32.gmra.mrb[0].mxu0 %v1539
        %v1541 = vpop.f32.mrb[0].mxu0
        %v1542 = vadd.f32 %v1460, %v1541
        %v1543 = vpop.f32.mrb[0].mxu0
        %1544 = vmatprep.mubr.f32.mxu0 0.0
        %v1545 = vand.u32 %v1211, 4294901760
        %v1546 = vsub.f32 %v1211, %v1545
        %v1547 = vand.u32 %v1546, 4294901760
        %1548 = vmatmul.mubr.f32.gmra.mrb[0].mxu0 %v1547
        %v1549 = vpop.f32.mrb[0].mxu0
        %v1550 = vadd.f32 %v1467, %v1549
        %v1551 = vpop.f32.mrb[0].mxu0
        %1552 = vdwg.mxu0
        %1553 = vmatprep.subr.mxu0 0.0
        %v1554 = vand.u32 %v1201, 4294901760
        %v1555 = vsub.f32 %v1201, %v1554
        %v1556 = vand.u32 %v1555, 4294901760
        %1557 = vmatpush1.msra.mxu0 %v1556
        %1558 = vmatprep.subr.mxu0 0.0
        %v1559 = vand.u32 %v1202, 4294901760
        %v1560 = vsub.f32 %v1202, %v1559
        %v1561 = vand.u32 %v1560, 4294901760
        %1562 = vmatpush1.msra.mxu0 %v1561
        %1563 = vmatprep.subr.mxu0 0.0
        %1564 = vmatpush1.msra.mxu0 0.0
        %1565 = vmatprep.subr.mxu0 0.0
        %1566 = vmatpush1.msra.mxu0 0.0
        %1567 = vmatprep.subr.mxu0 0.0
        %1568 = vmatpush1.msra.mxu0 0.0
        %1569 = vmatprep.subr.mxu0 0.0
        %1570 = vmatpush1.msra.mxu0 0.0
        %1571 = vmatprep.subr.mxu0 0.0
        %1572 = vmatpush1.msra.mxu0 0.0
        %1573 = vmatprep.subr.mxu0 0.0
        %1574 = vmatpush1.msra.mxu0 0.0
        %1575 = vmatprep.subr.mxu0 0.0
        %1576 = vmatpush1.msra.mxu0 0.0
        %1577 = vmatprep.subr.mxu0 0.0
        %1578 = vmatpush1.msra.mxu0 0.0
        %1579 = vmatprep.subr.mxu0 0.0
        %1580 = vmatpush1.msra.mxu0 0.0
        %1581 = vmatprep.subr.mxu0 0.0
        %1582 = vmatpush1.msra.mxu0 0.0
        %1583 = vmatprep.subr.mxu0 0.0
        %1584 = vmatpush1.msra.mxu0 0.0
        %1585 = vmatprep.subr.mxu0 0.0
        %1586 = vmatpush1.msra.mxu0 0.0
        %1587 = vmatprep.subr.mxu0 0.0
        %1588 = vmatpush1.msra.mxu0 0.0
        %1589 = vmatprep.subr.mxu0 0.0
        %1590 = vmatpush1.msra.mxu0 0.0
        %1591 = vmatprep.subr.mxu0 0.0
        %1592 = vmatpush1.msra.mxu0 0.0
        %1593 = vmatprep.subr.mxu0 0.0
        %1594 = vmatpush1.msra.mxu0 0.0
        %1595 = vmatprep.subr.mxu0 0.0
        %1596 = vmatpush1.msra.mxu0 0.0
        %1597 = vmatprep.subr.mxu0 0.0
        %1598 = vmatpush1.msra.mxu0 0.0
        %1599 = vmatprep.subr.mxu0 0.0
        %1600 = vmatpush1.msra.mxu0 0.0
        %1601 = vmatprep.subr.mxu0 0.0
        %1602 = vmatpush1.msra.mxu0 0.0
        %1603 = vmatprep.subr.mxu0 0.0
        %1604 = vmatpush1.msra.mxu0 0.0
        %1605 = vmatprep.subr.mxu0 0.0
        %1606 = vmatpush1.msra.mxu0 0.0
        %1607 = vmatprep.subr.mxu0 0.0
        %1608 = vmatpush1.msra.mxu0 0.0
        %1609 = vmatprep.subr.mxu0 0.0
        %1610 = vmatpush1.msra.mxu0 0.0
        %1611 = vmatprep.subr.mxu0 0.0
        %1612 = vmatpush1.msra.mxu0 0.0
        %1613 = vmatprep.subr.mxu0 0.0
        %1614 = vmatpush1.msra.mxu0 0.0
        %1615 = vmatprep.subr.mxu0 0.0
        %1616 = vmatpush1.msra.mxu0 0.0
        %1617 = vmatprep.subr.mxu0 0.0
        %1618 = vmatpush1.msra.mxu0 0.0
        %1619 = vmatprep.subr.mxu0 0.0
        %1620 = vmatpush1.msra.mxu0 0.0
        %1621 = vmatprep.subr.mxu0 0.0
        %1622 = vmatpush1.msra.mxu0 0.0
        %1623 = vmatprep.mubr.f32.mxu0 0.0
        %v1624 = vand.u32 %v1209, 4294901760
        %1625 = vmatmul.mubr.f32.gmra.mrb[0].mxu0 %v1624
        %v1626 = vpop.f32.mrb[0].mxu0
        %v1627 = vadd.f32 %v1542, %v1626
        %v1628 = vpop.f32.mrb[0].mxu0
        %1629 = vmatprep.mubr.f32.mxu0 0.0
        %v1630 = vand.u32 %v1211, 4294901760
        %1631 = vmatmul.mubr.f32.gmra.mrb[0].mxu0 %v1630
        %v1632 = vpop.f32.mrb[0].mxu0
        %v1633 = vadd.f32 %v1550, %v1632
        %v1634 = vpop.f32.mrb[0].mxu0
        %1635 = vdwg.mxu0
        %1636 = vmatprep.subr.mxu0 0.0
        %v1637 = vand.u32 %v1201, 4294901760
        %1638 = vmatpush1.msra.mxu0 %v1637
        %1639 = vmatprep.subr.mxu0 0.0
        %v1640 = vand.u32 %v1202, 4294901760
        %1641 = vmatpush1.msra.mxu0 %v1640
        %1642 = vmatprep.subr.mxu0 0.0
        %1643 = vmatpush1.msra.mxu0 0.0
        %1644 = vmatprep.subr.mxu0 0.0
        %1645 = vmatpush1.msra.mxu0 0.0
        %1646 = vmatprep.subr.mxu0 0.0
        %1647 = vmatpush1.msra.mxu0 0.0
        %1648 = vmatprep.subr.mxu0 0.0
        %1649 = vmatpush1.msra.mxu0 0.0
        %1650 = vmatprep.subr.mxu0 0.0
        %1651 = vmatpush1.msra.mxu0 0.0
        %1652 = vmatprep.subr.mxu0 0.0
        %1653 = vmatpush1.msra.mxu0 0.0
        %1654 = vmatprep.subr.mxu0 0.0
        %1655 = vmatpush1.msra.mxu0 0.0
        %1656 = vmatprep.subr.mxu0 0.0
        %1657 = vmatpush1.msra.mxu0 0.0
        %1658 = vmatprep.subr.mxu0 0.0
        %1659 = vmatpush1.msra.mxu0 0.0
        %1660 = vmatprep.subr.mxu0 0.0
        %1661 = vmatpush1.msra.mxu0 0.0
        %1662 = vmatprep.subr.mxu0 0.0
        %1663 = vmatpush1.msra.mxu0 0.0
        %1664 = vmatprep.subr.mxu0 0.0
        %1665 = vmatpush1.msra.mxu0 0.0
        %1666 = vmatprep.subr.mxu0 0.0
        %1667 = vmatpush1.msra.mxu0 0.0
        %1668 = vmatprep.subr.mxu0 0.0
        %1669 = vmatpush1.msra.mxu0 0.0
        %1670 = vmatprep.subr.mxu0 0.0
        %1671 = vmatpush1.msra.mxu0 0.0
        %1672 = vmatprep.subr.mxu0 0.0
        %1673 = vmatpush1.msra.mxu0 0.0
        %1674 = vmatprep.subr.mxu0 0.0
        %1675 = vmatpush1.msra.mxu0 0.0
        %1676 = vmatprep.subr.mxu0 0.0
        %1677 = vmatpush1.msra.mxu0 0.0
        %1678 = vmatprep.subr.mxu0 0.0
        %1679 = vmatpush1.msra.mxu0 0.0
        %1680 = vmatprep.subr.mxu0 0.0
        %1681 = vmatpush1.msra.mxu0 0.0
        %1682 = vmatprep.subr.mxu0 0.0
        %1683 = vmatpush1.msra.mxu0 0.0
        %1684 = vmatprep.subr.mxu0 0.0
        %1685 = vmatpush1.msra.mxu0 0.0
        %1686 = vmatprep.subr.mxu0 0.0
        %1687 = vmatpush1.msra.mxu0 0.0
        %1688 = vmatprep.subr.mxu0 0.0
        %1689 = vmatpush1.msra.mxu0 0.0
        %1690 = vmatprep.subr.mxu0 0.0
        %1691 = vmatpush1.msra.mxu0 0.0
        %1692 = vmatprep.subr.mxu0 0.0
        %1693 = vmatpush1.msra.mxu0 0.0
        %1694 = vmatprep.subr.mxu0 0.0
        %1695 = vmatpush1.msra.mxu0 0.0
        %1696 = vmatprep.subr.mxu0 0.0
        %1697 = vmatpush1.msra.mxu0 0.0
        %1698 = vmatprep.subr.mxu0 0.0
        %1699 = vmatpush1.msra.mxu0 0.0
        %1700 = vmatprep.subr.mxu0 0.0
        %1701 = vmatpush1.msra.mxu0 0.0
        %1702 = vmatprep.mubr.f32.mxu0 0.0
        %v1703 = vand.u32 %v1209, 4294901760
        %1704 = vmatmul.mubr.f32.gmra.mrb[0].mxu0 %v1703
        %v1705 = vpop.f32.mrb[0].mxu0
        %v1706 = vadd.f32 %v1627, %v1705
        %v1707 = vpop.f32.mrb[0].mxu0
        %1708 = vmatprep.mubr.f32.mxu0 0.0
        %v1709 = vand.u32 %v1211, 4294901760
        %1710 = vmatmul.mubr.f32.gmra.mrb[0].mxu0 %v1709
        %v1711 = vpop.f32.mrb[0].mxu0
        %v1712 = vadd.f32 %v1633, %v1711
        %v1713 = vpop.f32.mrb[0].mxu0
        %1714 = vdwg.mxu0
        %v1715 = vadd.f32 %v1191, %v1706
        %v1716 = vadd.f32 %v1197, %v1712
        %s1717 = scalar_lea.vmem %s1, 48
        %v1718 = vld [vmem:[%s1717] sm:$0xff]
        %v1719 = vld [vmem:[%s1717 + $0x8] sm:$0xff]
        %vm1720 = vcmask 1044480
        %v1721 = vrot.slane %v170, 3
        %v1722 = vrot.slane %v171, 3
        %v1723 = vsel %vm1720, %v1721, %v1722
        %v1724 = vrot.slane %v172, 3
        %v1725 = vsel %vm1720, %v1722, %v1724
        %v1726 = vsel %vm187, %v1723, 0
        %v1728 = vsel %vm187, %v1725, 0
        %1730 = vmatprep.subr.mxu0 0.0
        %v1731 = vand.u32 %v1718, 4294901760
        %1732 = vmatpush1.msra.mxu0 %v1731
        %1733 = vmatprep.subr.mxu0 0.0
        %v1734 = vand.u32 %v1719, 4294901760
        %1735 = vmatpush1.msra.mxu0 %v1734
        %1736 = vmatprep.subr.mxu0 0.0
        %1737 = vmatpush1.msra.mxu0 0.0
        %1738 = vmatprep.subr.mxu0 0.0
        %1739 = vmatpush1.msra.mxu0 0.0
        %1740 = vmatprep.subr.mxu0 0.0
        %1741 = vmatpush1.msra.mxu0 0.0
        %1742 = vmatprep.subr.mxu0 0.0
        %1743 = vmatpush1.msra.mxu0 0.0
        %1744 = vmatprep.subr.mxu0 0.0
        %1745 = vmatpush1.msra.mxu0 0.0
        %1746 = vmatprep.subr.mxu0 0.0
        %1747 = vmatpush1.msra.mxu0 0.0
        %1748 = vmatprep.subr.mxu0 0.0
        %1749 = vmatpush1.msra.mxu0 0.0
        %1750 = vmatprep.subr.mxu0 0.0
        %1751 = vmatpush1.msra.mxu0 0.0
        %1752 = vmatprep.subr.mxu0 0.0
        %1753 = vmatpush1.msra.mxu0 0.0
        %1754 = vmatprep.subr.mxu0 0.0
        %1755 = vmatpush1.msra.mxu0 0.0
        %1756 = vmatprep.subr.mxu0 0.0
        %1757 = vmatpush1.msra.mxu0 0.0
        %1758 = vmatprep.subr.mxu0 0.0
        %1759 = vmatpush1.msra.mxu0 0.0
        %1760 = vmatprep.subr.mxu0 0.0
        %1761 = vmatpush1.msra.mxu0 0.0
        %1762 = vmatprep.subr.mxu0 0.0
        %1763 = vmatpush1.msra.mxu0 0.0
        %1764 = vmatprep.subr.mxu0 0.0
        %1765 = vmatpush1.msra.mxu0 0.0
        %1766 = vmatprep.subr.mxu0 0.0
        %1767 = vmatpush1.msra.mxu0 0.0
        %1768 = vmatprep.subr.mxu0 0.0
        %1769 = vmatpush1.msra.mxu0 0.0
        %1770 = vmatprep.subr.mxu0 0.0
        %1771 = vmatpush1.msra.mxu0 0.0
        %1772 = vmatprep.subr.mxu0 0.0
        %1773 = vmatpush1.msra.mxu0 0.0
        %1774 = vmatprep.subr.mxu0 0.0
        %1775 = vmatpush1.msra.mxu0 0.0
        %1776 = vmatprep.subr.mxu0 0.0
        %1777 = vmatpush1.msra.mxu0 0.0
        %1778 = vmatprep.subr.mxu0 0.0
        %1779 = vmatpush1.msra.mxu0 0.0
        %1780 = vmatprep.subr.mxu0 0.0
        %1781 = vmatpush1.msra.mxu0 0.0
        %1782 = vmatprep.subr.mxu0 0.0
        %1783 = vmatpush1.msra.mxu0 0.0
        %1784 = vmatprep.subr.mxu0 0.0
        %1785 = vmatpush1.msra.mxu0 0.0
        %1786 = vmatprep.subr.mxu0 0.0
        %1787 = vmatpush1.msra.mxu0 0.0
        %1788 = vmatprep.subr.mxu0 0.0
        %1789 = vmatpush1.msra.mxu0 0.0
        %1790 = vmatprep.subr.mxu0 0.0
        %1791 = vmatpush1.msra.mxu0 0.0
        %1792 = vmatprep.subr.mxu0 0.0
        %1793 = vmatpush1.msra.mxu0 0.0
        %1794 = vmatprep.subr.mxu0 0.0
        %1795 = vmatpush1.msra.mxu0 0.0
        %1796 = vmatprep.mubr.f32.mxu0 0.0
        %v1797 = vand.u32 %v1726, 4294901760
        %v1798 = vsub.f32 %v1726, %v1797
        %v1799 = vand.u32 %v1798, 4294901760
        %v1800 = vsub.f32 %v1798, %v1799
        %v1801 = vand.u32 %v1800, 4294901760
        %1802 = vmatmul.mubr.f32.gmra.mrb[0].mxu0 %v1801
        %v1803 = vpop.f32.mrb[0].mxu0
        %v1804 = vadd.f32 0.0, %v1803
        %v1805 = vpop.f32.mrb[0].mxu0
        %1806 = vmatprep.mubr.f32.mxu0 0.0
        %v1807 = vand.u32 %v1728, 4294901760
        %v1808 = vsub.f32 %v1728, %v1807
        %v1809 = vand.u32 %v1808, 4294901760
        %v1810 = vsub.f32 %v1808, %v1809
        %v1811 = vand.u32 %v1810, 4294901760
        %1812 = vmatmul.mubr.f32.gmra.mrb[0].mxu0 %v1811
        %v1813 = vpop.f32.mrb[0].mxu0
        %v1814 = vadd.f32 0.0, %v1813
        %v1815 = vpop.f32.mrb[0].mxu0
        %1816 = vdwg.mxu0
        %1817 = vmatprep.subr.mxu0 0.0
        %v1818 = vand.u32 %v1718, 4294901760
        %v1819 = vsub.f32 %v1718, %v1818
        %v1820 = vand.u32 %v1819, 4294901760
        %v1821 = vsub.f32 %v1819, %v1820
        %v1822 = vand.u32 %v1821, 4294901760
        %1823 = vmatpush1.msra.mxu0 %v1822
        %1824 = vmatprep.subr.mxu0 0.0
        %v1825 = vand.u32 %v1719, 4294901760
        %v1826 = vsub.f32 %v1719, %v1825
        %v1827 = vand.u32 %v1826, 4294901760
        %v1828 = vsub.f32 %v1826, %v1827
        %v1829 = vand.u32 %v1828, 4294901760
        %1830 = vmatpush1.msra.mxu0 %v1829
        %1831 = vmatprep.subr.mxu0 0.0
        %1832 = vmatpush1.msra.mxu0 0.0
        %1833 = vmatprep.subr.mxu0 0.0
        %1834 = vmatpush1.msra.mxu0 0.0
        %1835 = vmatprep.subr.mxu0 0.0
        %1836 = vmatpush1.msra.mxu0 0.0
        %1837 = vmatprep.subr.mxu0 0.0
        %1838 = vmatpush1.msra.mxu0 0.0
        %1839 = vmatprep.subr.mxu0 0.0
        %1840 = vmatpush1.msra.mxu0 0.0
        %1841 = vmatprep.subr.mxu0 0.0
        %1842 = vmatpush1.msra.mxu0 0.0
        %1843 = vmatprep.subr.mxu0 0.0
        %1844 = vmatpush1.msra.mxu0 0.0
        %1845 = vmatprep.subr.mxu0 0.0
        %1846 = vmatpush1.msra.mxu0 0.0
        %1847 = vmatprep.subr.mxu0 0.0
        %1848 = vmatpush1.msra.mxu0 0.0
        %1849 = vmatprep.subr.mxu0 0.0
        %1850 = vmatpush1.msra.mxu0 0.0
        %1851 = vmatprep.subr.mxu0 0.0
        %1852 = vmatpush1.msra.mxu0 0.0
        %1853 = vmatprep.subr.mxu0 0.0
        %1854 = vmatpush1.msra.mxu0 0.0
        %1855 = vmatprep.subr.mxu0 0.0
        %1856 = vmatpush1.msra.mxu0 0.0
        %1857 = vmatprep.subr.mxu0 0.0
        %1858 = vmatpush1.msra.mxu0 0.0
        %1859 = vmatprep.subr.mxu0 0.0
        %1860 = vmatpush1.msra.mxu0 0.0
        %1861 = vmatprep.subr.mxu0 0.0
        %1862 = vmatpush1.msra.mxu0 0.0
        %1863 = vmatprep.subr.mxu0 0.0
        %1864 = vmatpush1.msra.mxu0 0.0
        %1865 = vmatprep.subr.mxu0 0.0
        %1866 = vmatpush1.msra.mxu0 0.0
        %1867 = vmatprep.subr.mxu0 0.0
        %1868 = vmatpush1.msra.mxu0 0.0
        %1869 = vmatprep.subr.mxu0 0.0
        %1870 = vmatpush1.msra.mxu0 0.0
        %1871 = vmatprep.subr.mxu0 0.0
        %1872 = vmatpush1.msra.mxu0 0.0
        %1873 = vmatprep.subr.mxu0 0.0
        %1874 = vmatpush1.msra.mxu0 0.0
        %1875 = vmatprep.subr.mxu0 0.0
        %1876 = vmatpush1.msra.mxu0 0.0
        %1877 = vmatprep.subr.mxu0 0.0
        %1878 = vmatpush1.msra.mxu0 0.0
        %1879 = vmatprep.subr.mxu0 0.0
        %1880 = vmatpush1.msra.mxu0 0.0
        %1881 = vmatprep.subr.mxu0 0.0
        %1882 = vmatpush1.msra.mxu0 0.0
        %1883 = vmatprep.subr.mxu0 0.0
        %1884 = vmatpush1.msra.mxu0 0.0
        %1885 = vmatprep.subr.mxu0 0.0
        %1886 = vmatpush1.msra.mxu0 0.0
        %1887 = vmatprep.subr.mxu0 0.0
        %1888 = vmatpush1.msra.mxu0 0.0
        %1889 = vmatprep.subr.mxu0 0.0
        %1890 = vmatpush1.msra.mxu0 0.0
        %1891 = vmatprep.mubr.f32.mxu0 0.0
        %v1892 = vand.u32 %v1726, 4294901760
        %1893 = vmatmul.mubr.f32.gmra.mrb[0].mxu0 %v1892
        %v1894 = vpop.f32.mrb[0].mxu0
        %v1895 = vadd.f32 %v1804, %v1894
        %v1896 = vpop.f32.mrb[0].mxu0
        %1897 = vmatprep.mubr.f32.mxu0 0.0
        %v1898 = vand.u32 %v1728, 4294901760
        %1899 = vmatmul.mubr.f32.gmra.mrb[0].mxu0 %v1898
        %v1900 = vpop.f32.mrb[0].mxu0
        %v1901 = vadd.f32 %v1814, %v1900
        %v1902 = vpop.f32.mrb[0].mxu0
        %1903 = vdwg.mxu0
        %1904 = vmatprep.subr.mxu0 0.0
        %v1905 = vand.u32 %v1718, 4294901760
        %v1906 = vsub.f32 %v1718, %v1905
        %1907 = vmatpush1.msra.mxu0 %v1906
        %1908 = vmatprep.subr.mxu0 0.0
        %v1909 = vand.u32 %v1719, 4294901760
        %v1910 = vsub.f32 %v1719, %v1909
        %1911 = vmatpush1.msra.mxu0 %v1910
        %1912 = vmatprep.subr.mxu0 0.0
        %1913 = vmatpush1.msra.mxu0 0.0
        %1914 = vmatprep.subr.mxu0 0.0
        %1915 = vmatpush1.msra.mxu0 0.0
        %1916 = vmatprep.subr.mxu0 0.0
        %1917 = vmatpush1.msra.mxu0 0.0
        %1918 = vmatprep.subr.mxu0 0.0
        %1919 = vmatpush1.msra.mxu0 0.0
        %1920 = vmatprep.subr.mxu0 0.0
        %1921 = vmatpush1.msra.mxu0 0.0
        %1922 = vmatprep.subr.mxu0 0.0
        %1923 = vmatpush1.msra.mxu0 0.0
        %1924 = vmatprep.subr.mxu0 0.0
        %1925 = vmatpush1.msra.mxu0 0.0
        %1926 = vmatprep.subr.mxu0 0.0
        %1927 = vmatpush1.msra.mxu0 0.0
        %1928 = vmatprep.subr.mxu0 0.0
        %1929 = vmatpush1.msra.mxu0 0.0
        %1930 = vmatprep.subr.mxu0 0.0
        %1931 = vmatpush1.msra.mxu0 0.0
        %1932 = vmatprep.subr.mxu0 0.0
        %1933 = vmatpush1.msra.mxu0 0.0
        %1934 = vmatprep.subr.mxu0 0.0
        %1935 = vmatpush1.msra.mxu0 0.0
        %1936 = vmatprep.subr.mxu0 0.0
        %1937 = vmatpush1.msra.mxu0 0.0
        %1938 = vmatprep.subr.mxu0 0.0
        %1939 = vmatpush1.msra.mxu0 0.0
        %1940 = vmatprep.subr.mxu0 0.0
        %1941 = vmatpush1.msra.mxu0 0.0
        %1942 = vmatprep.subr.mxu0 0.0
        %1943 = vmatpush1.msra.mxu0 0.0
        %1944 = vmatprep.subr.mxu0 0.0
        %1945 = vmatpush1.msra.mxu0 0.0
        %1946 = vmatprep.subr.mxu0 0.0
        %1947 = vmatpush1.msra.mxu0 0.0
        %1948 = vmatprep.subr.mxu0 0.0
        %1949 = vmatpush1.msra.mxu0 0.0
        %1950 = vmatprep.subr.mxu0 0.0
        %1951 = vmatpush1.msra.mxu0 0.0
        %1952 = vmatprep.subr.mxu0 0.0
        %1953 = vmatpush1.msra.mxu0 0.0
        %1954 = vmatprep.subr.mxu0 0.0
        %1955 = vmatpush1.msra.mxu0 0.0
        %1956 = vmatprep.subr.mxu0 0.0
        %1957 = vmatpush1.msra.mxu0 0.0
        %1958 = vmatprep.subr.mxu0 0.0
        %1959 = vmatpush1.msra.mxu0 0.0
        %1960 = vmatprep.subr.mxu0 0.0
        %1961 = vmatpush1.msra.mxu0 0.0
        %1962 = vmatprep.subr.mxu0 0.0
        %1963 = vmatpush1.msra.mxu0 0.0
        %1964 = vmatprep.subr.mxu0 0.0
        %1965 = vmatpush1.msra.mxu0 0.0
        %1966 = vmatprep.subr.mxu0 0.0
        %1967 = vmatpush1.msra.mxu0 0.0
        %1968 = vmatprep.subr.mxu0 0.0
        %1969 = vmatpush1.msra.mxu0 0.0
        %1970 = vmatprep.subr.mxu0 0.0
        %1971 = vmatpush1.msra.mxu0 0.0
        %1972 = vmatprep.mubr.f32.mxu0 0.0
        %v1973 = vand.u32 %v1726, 4294901760
        %v1974 = vsub.f32 %v1726, %v1973
        %1975 = vmatmul.mubr.f32.gmra.mrb[0].mxu0 %v1974
        %v1976 = vpop.f32.mrb[0].mxu0
        %v1977 = vadd.f32 %v1895, %v1976
        %v1978 = vpop.f32.mrb[0].mxu0
        %1979 = vmatprep.mubr.f32.mxu0 0.0
        %v1980 = vand.u32 %v1728, 4294901760
        %v1981 = vsub.f32 %v1728, %v1980
        %1982 = vmatmul.mubr.f32.gmra.mrb[0].mxu0 %v1981
        %v1983 = vpop.f32.mrb[0].mxu0
        %v1984 = vadd.f32 %v1901, %v1983
        %v1985 = vpop.f32.mrb[0].mxu0
        %1986 = vdwg.mxu0
        %1987 = vmatprep.subr.mxu0 0.0
        %v1988 = vand.u32 %v1718, 4294901760
        %1989 = vmatpush1.msra.mxu0 %v1988
        %1990 = vmatprep.subr.mxu0 0.0
        %v1991 = vand.u32 %v1719, 4294901760
        %1992 = vmatpush1.msra.mxu0 %v1991
        %1993 = vmatprep.subr.mxu0 0.0
        %1994 = vmatpush1.msra.mxu0 0.0
        %1995 = vmatprep.subr.mxu0 0.0
        %1996 = vmatpush1.msra.mxu0 0.0
        %1997 = vmatprep.subr.mxu0 0.0
        %1998 = vmatpush1.msra.mxu0 0.0
        %1999 = vmatprep.subr.mxu0 0.0
        %2000 = vmatpush1.msra.mxu0 0.0
        %2001 = vmatprep.subr.mxu0 0.0
        %2002 = vmatpush1.msra.mxu0 0.0
        %2003 = vmatprep.subr.mxu0 0.0
        %2004 = vmatpush1.msra.mxu0 0.0
        %2005 = vmatprep.subr.mxu0 0.0
        %2006 = vmatpush1.msra.mxu0 0.0
        %2007 = vmatprep.subr.mxu0 0.0
        %2008 = vmatpush1.msra.mxu0 0.0
        %2009 = vmatprep.subr.mxu0 0.0
        %2010 = vmatpush1.msra.mxu0 0.0
        %2011 = vmatprep.subr.mxu0 0.0
        %2012 = vmatpush1.msra.mxu0 0.0
        %2013 = vmatprep.subr.mxu0 0.0
        %2014 = vmatpush1.msra.mxu0 0.0
        %2015 = vmatprep.subr.mxu0 0.0
        %2016 = vmatpush1.msra.mxu0 0.0
        %2017 = vmatprep.subr.mxu0 0.0
        %2018 = vmatpush1.msra.mxu0 0.0
        %2019 = vmatprep.subr.mxu0 0.0
        %2020 = vmatpush1.msra.mxu0 0.0
        %2021 = vmatprep.subr.mxu0 0.0
        %2022 = vmatpush1.msra.mxu0 0.0
        %2023 = vmatprep.subr.mxu0 0.0
        %2024 = vmatpush1.msra.mxu0 0.0
        %2025 = vmatprep.subr.mxu0 0.0
        %2026 = vmatpush1.msra.mxu0 0.0
        %2027 = vmatprep.subr.mxu0 0.0
        %2028 = vmatpush1.msra.mxu0 0.0
        %2029 = vmatprep.subr.mxu0 0.0
        %2030 = vmatpush1.msra.mxu0 0.0
        %2031 = vmatprep.subr.mxu0 0.0
        %2032 = vmatpush1.msra.mxu0 0.0
        %2033 = vmatprep.subr.mxu0 0.0
        %2034 = vmatpush1.msra.mxu0 0.0
        %2035 = vmatprep.subr.mxu0 0.0
        %2036 = vmatpush1.msra.mxu0 0.0
        %2037 = vmatprep.subr.mxu0 0.0
        %2038 = vmatpush1.msra.mxu0 0.0
        %2039 = vmatprep.subr.mxu0 0.0
        %2040 = vmatpush1.msra.mxu0 0.0
        %2041 = vmatprep.subr.mxu0 0.0
        %2042 = vmatpush1.msra.mxu0 0.0
        %2043 = vmatprep.subr.mxu0 0.0
        %2044 = vmatpush1.msra.mxu0 0.0
        %2045 = vmatprep.subr.mxu0 0.0
        %2046 = vmatpush1.msra.mxu0 0.0
        %2047 = vmatprep.subr.mxu0 0.0
        %2048 = vmatpush1.msra.mxu0 0.0
        %2049 = vmatprep.subr.mxu0 0.0
        %2050 = vmatpush1.msra.mxu0 0.0
        %2051 = vmatprep.subr.mxu0 0.0
        %2052 = vmatpush1.msra.mxu0 0.0
        %2053 = vmatprep.mubr.f32.mxu0 0.0
        %v2054 = vand.u32 %v1726, 4294901760
        %v2055 = vsub.f32 %v1726, %v2054
        %v2056 = vand.u32 %v2055, 4294901760
        %2057 = vmatmul.mubr.f32.gmra.mrb[0].mxu0 %v2056
        %v2058 = vpop.f32.mrb[0].mxu0
        %v2059 = vadd.f32 %v1977, %v2058
        %v2060 = vpop.f32.mrb[0].mxu0
        %2061 = vmatprep.mubr.f32.mxu0 0.0
        %v2062 = vand.u32 %v1728, 4294901760
        %v2063 = vsub.f32 %v1728, %v2062
        %v2064 = vand.u32 %v2063, 4294901760
        %2065 = vmatmul.mubr.f32.gmra.mrb[0].mxu0 %v2064
        %v2066 = vpop.f32.mrb[0].mxu0
        %v2067 = vadd.f32 %v1984, %v2066
        %v2068 = vpop.f32.mrb[0].mxu0
        %2069 = vdwg.mxu0
        %2070 = vmatprep.subr.mxu0 0.0
        %v2071 = vand.u32 %v1718, 4294901760
        %v2072 = vsub.f32 %v1718, %v2071
        %v2073 = vand.u32 %v2072, 4294901760
        %2074 = vmatpush1.msra.mxu0 %v2073
        %2075 = vmatprep.subr.mxu0 0.0
        %v2076 = vand.u32 %v1719, 4294901760
        %v2077 = vsub.f32 %v1719, %v2076
        %v2078 = vand.u32 %v2077, 4294901760
        %2079 = vmatpush1.msra.mxu0 %v2078
        %2080 = vmatprep.subr.mxu0 0.0
        %2081 = vmatpush1.msra.mxu0 0.0
        %2082 = vmatprep.subr.mxu0 0.0
        %2083 = vmatpush1.msra.mxu0 0.0
        %2084 = vmatprep.subr.mxu0 0.0
        %2085 = vmatpush1.msra.mxu0 0.0
        %2086 = vmatprep.subr.mxu0 0.0
        %2087 = vmatpush1.msra.mxu0 0.0
        %2088 = vmatprep.subr.mxu0 0.0
        %2089 = vmatpush1.msra.mxu0 0.0
        %2090 = vmatprep.subr.mxu0 0.0
        %2091 = vmatpush1.msra.mxu0 0.0
        %2092 = vmatprep.subr.mxu0 0.0
        %2093 = vmatpush1.msra.mxu0 0.0
        %2094 = vmatprep.subr.mxu0 0.0
        %2095 = vmatpush1.msra.mxu0 0.0
        %2096 = vmatprep.subr.mxu0 0.0
        %2097 = vmatpush1.msra.mxu0 0.0
        %2098 = vmatprep.subr.mxu0 0.0
        %2099 = vmatpush1.msra.mxu0 0.0
        %2100 = vmatprep.subr.mxu0 0.0
        %2101 = vmatpush1.msra.mxu0 0.0
        %2102 = vmatprep.subr.mxu0 0.0
        %2103 = vmatpush1.msra.mxu0 0.0
        %2104 = vmatprep.subr.mxu0 0.0
        %2105 = vmatpush1.msra.mxu0 0.0
        %2106 = vmatprep.subr.mxu0 0.0
        %2107 = vmatpush1.msra.mxu0 0.0
        %2108 = vmatprep.subr.mxu0 0.0
        %2109 = vmatpush1.msra.mxu0 0.0
        %2110 = vmatprep.subr.mxu0 0.0
        %2111 = vmatpush1.msra.mxu0 0.0
        %2112 = vmatprep.subr.mxu0 0.0
        %2113 = vmatpush1.msra.mxu0 0.0
        %2114 = vmatprep.subr.mxu0 0.0
        %2115 = vmatpush1.msra.mxu0 0.0
        %2116 = vmatprep.subr.mxu0 0.0
        %2117 = vmatpush1.msra.mxu0 0.0
        %2118 = vmatprep.subr.mxu0 0.0
        %2119 = vmatpush1.msra.mxu0 0.0
        %2120 = vmatprep.subr.mxu0 0.0
        %2121 = vmatpush1.msra.mxu0 0.0
        %2122 = vmatprep.subr.mxu0 0.0
        %2123 = vmatpush1.msra.mxu0 0.0
        %2124 = vmatprep.subr.mxu0 0.0
        %2125 = vmatpush1.msra.mxu0 0.0
        %2126 = vmatprep.subr.mxu0 0.0
        %2127 = vmatpush1.msra.mxu0 0.0
        %2128 = vmatprep.subr.mxu0 0.0
        %2129 = vmatpush1.msra.mxu0 0.0
        %2130 = vmatprep.subr.mxu0 0.0
        %2131 = vmatpush1.msra.mxu0 0.0
        %2132 = vmatprep.subr.mxu0 0.0
        %2133 = vmatpush1.msra.mxu0 0.0
        %2134 = vmatprep.subr.mxu0 0.0
        %2135 = vmatpush1.msra.mxu0 0.0
        %2136 = vmatprep.subr.mxu0 0.0
        %2137 = vmatpush1.msra.mxu0 0.0
        %2138 = vmatprep.subr.mxu0 0.0
        %2139 = vmatpush1.msra.mxu0 0.0
        %2140 = vmatprep.mubr.f32.mxu0 0.0
        %v2141 = vand.u32 %v1726, 4294901760
        %2142 = vmatmul.mubr.f32.gmra.mrb[0].mxu0 %v2141
        %v2143 = vpop.f32.mrb[0].mxu0
        %v2144 = vadd.f32 %v2059, %v2143
        %v2145 = vpop.f32.mrb[0].mxu0
        %2146 = vmatprep.mubr.f32.mxu0 0.0
        %v2147 = vand.u32 %v1728, 4294901760
        %2148 = vmatmul.mubr.f32.gmra.mrb[0].mxu0 %v2147
        %v2149 = vpop.f32.mrb[0].mxu0
        %v2150 = vadd.f32 %v2067, %v2149
        %v2151 = vpop.f32.mrb[0].mxu0
        %2152 = vdwg.mxu0
        %2153 = vmatprep.subr.mxu0 0.0
        %v2154 = vand.u32 %v1718, 4294901760
        %2155 = vmatpush1.msra.mxu0 %v2154
        %2156 = vmatprep.subr.mxu0 0.0
        %v2157 = vand.u32 %v1719, 4294901760
        %2158 = vmatpush1.msra.mxu0 %v2157
        %2159 = vmatprep.subr.mxu0 0.0
        %2160 = vmatpush1.msra.mxu0 0.0
        %2161 = vmatprep.subr.mxu0 0.0
        %2162 = vmatpush1.msra.mxu0 0.0
        %2163 = vmatprep.subr.mxu0 0.0
        %2164 = vmatpush1.msra.mxu0 0.0
        %2165 = vmatprep.subr.mxu0 0.0
        %2166 = vmatpush1.msra.mxu0 0.0
        %2167 = vmatprep.subr.mxu0 0.0
        %2168 = vmatpush1.msra.mxu0 0.0
        %2169 = vmatprep.subr.mxu0 0.0
        %2170 = vmatpush1.msra.mxu0 0.0
        %2171 = vmatprep.subr.mxu0 0.0
        %2172 = vmatpush1.msra.mxu0 0.0
        %2173 = vmatprep.subr.mxu0 0.0
        %2174 = vmatpush1.msra.mxu0 0.0
        %2175 = vmatprep.subr.mxu0 0.0
        %2176 = vmatpush1.msra.mxu0 0.0
        %2177 = vmatprep.subr.mxu0 0.0
        %2178 = vmatpush1.msra.mxu0 0.0
        %2179 = vmatprep.subr.mxu0 0.0
        %2180 = vmatpush1.msra.mxu0 0.0
        %2181 = vmatprep.subr.mxu0 0.0
        %2182 = vmatpush1.msra.mxu0 0.0
        %2183 = vmatprep.subr.mxu0 0.0
        %2184 = vmatpush1.msra.mxu0 0.0
        %2185 = vmatprep.subr.mxu0 0.0
        %2186 = vmatpush1.msra.mxu0 0.0
        %2187 = vmatprep.subr.mxu0 0.0
        %2188 = vmatpush1.msra.mxu0 0.0
        %2189 = vmatprep.subr.mxu0 0.0
        %2190 = vmatpush1.msra.mxu0 0.0
        %2191 = vmatprep.subr.mxu0 0.0
        %2192 = vmatpush1.msra.mxu0 0.0
        %2193 = vmatprep.subr.mxu0 0.0
        %2194 = vmatpush1.msra.mxu0 0.0
        %2195 = vmatprep.subr.mxu0 0.0
        %2196 = vmatpush1.msra.mxu0 0.0
        %2197 = vmatprep.subr.mxu0 0.0
        %2198 = vmatpush1.msra.mxu0 0.0
        %2199 = vmatprep.subr.mxu0 0.0
        %2200 = vmatpush1.msra.mxu0 0.0
        %2201 = vmatprep.subr.mxu0 0.0
        %2202 = vmatpush1.msra.mxu0 0.0
        %2203 = vmatprep.subr.mxu0 0.0
        %2204 = vmatpush1.msra.mxu0 0.0
        %2205 = vmatprep.subr.mxu0 0.0
        %2206 = vmatpush1.msra.mxu0 0.0
        %2207 = vmatprep.subr.mxu0 0.0
        %2208 = vmatpush1.msra.mxu0 0.0
        %2209 = vmatprep.subr.mxu0 0.0
        %2210 = vmatpush1.msra.mxu0 0.0
        %2211 = vmatprep.subr.mxu0 0.0
        %2212 = vmatpush1.msra.mxu0 0.0
        %2213 = vmatprep.subr.mxu0 0.0
        %2214 = vmatpush1.msra.mxu0 0.0
        %2215 = vmatprep.subr.mxu0 0.0
        %2216 = vmatpush1.msra.mxu0 0.0
        %2217 = vmatprep.subr.mxu0 0.0
        %2218 = vmatpush1.msra.mxu0 0.0
        %2219 = vmatprep.mubr.f32.mxu0 0.0
        %v2220 = vand.u32 %v1726, 4294901760
        %2221 = vmatmul.mubr.f32.gmra.mrb[0].mxu0 %v2220
        %v2222 = vpop.f32.mrb[0].mxu0
        %v2223 = vadd.f32 %v2144, %v2222
        %v2224 = vpop.f32.mrb[0].mxu0
        %2225 = vmatprep.mubr.f32.mxu0 0.0
        %v2226 = vand.u32 %v1728, 4294901760
        %2227 = vmatmul.mubr.f32.gmra.mrb[0].mxu0 %v2226
        %v2228 = vpop.f32.mrb[0].mxu0
        %v2229 = vadd.f32 %v2150, %v2228
        %v2230 = vpop.f32.mrb[0].mxu0
        %2231 = vdwg.mxu0
        %v2232 = vadd.f32 %v1715, %v2223
        %v2233 = vadd.f32 %v1716, %v2229
        %s2234 = scalar_lea.vmem %s1, 64
        %v2235 = vld [vmem:[%s2234] sm:$0xff]
        %v2236 = vld [vmem:[%s2234 + $0x8] sm:$0xff]
        %vm2237 = vcmask 1043456
        %v2238 = vrot.slane %v170, 4
        %v2239 = vrot.slane %v171, 4
        %v2240 = vsel %vm2237, %v2238, %v2239
        %v2241 = vrot.slane %v172, 4
        %v2242 = vsel %vm2237, %v2239, %v2241
        %v2243 = vsel %vm187, %v2240, 0
        %v2245 = vsel %vm187, %v2242, 0
        %2247 = vmatprep.subr.mxu0 0.0
        %v2248 = vand.u32 %v2235, 4294901760
        %2249 = vmatpush1.msra.mxu0 %v2248
        %2250 = vmatprep.subr.mxu0 0.0
        %v2251 = vand.u32 %v2236, 4294901760
        %2252 = vmatpush1.msra.mxu0 %v2251
        %2253 = vmatprep.subr.mxu0 0.0
        %2254 = vmatpush1.msra.mxu0 0.0
        %2255 = vmatprep.subr.mxu0 0.0
        %2256 = vmatpush1.msra.mxu0 0.0
        %2257 = vmatprep.subr.mxu0 0.0
        %2258 = vmatpush1.msra.mxu0 0.0
        %2259 = vmatprep.subr.mxu0 0.0
        %2260 = vmatpush1.msra.mxu0 0.0
        %2261 = vmatprep.subr.mxu0 0.0
        %2262 = vmatpush1.msra.mxu0 0.0
        %2263 = vmatprep.subr.mxu0 0.0
        %2264 = vmatpush1.msra.mxu0 0.0
        %2265 = vmatprep.subr.mxu0 0.0
        %2266 = vmatpush1.msra.mxu0 0.0
        %2267 = vmatprep.subr.mxu0 0.0
        %2268 = vmatpush1.msra.mxu0 0.0
        %2269 = vmatprep.subr.mxu0 0.0
        %2270 = vmatpush1.msra.mxu0 0.0
        %2271 = vmatprep.subr.mxu0 0.0
        %2272 = vmatpush1.msra.mxu0 0.0
        %2273 = vmatprep.subr.mxu0 0.0
        %2274 = vmatpush1.msra.mxu0 0.0
        %2275 = vmatprep.subr.mxu0 0.0
        %2276 = vmatpush1.msra.mxu0 0.0
        %2277 = vmatprep.subr.mxu0 0.0
        %2278 = vmatpush1.msra.mxu0 0.0
        %2279 = vmatprep.subr.mxu0 0.0
        %2280 = vmatpush1.msra.mxu0 0.0
        %2281 = vmatprep.subr.mxu0 0.0
        %2282 = vmatpush1.msra.mxu0 0.0
        %2283 = vmatprep.subr.mxu0 0.0
        %2284 = vmatpush1.msra.mxu0 0.0
        %2285 = vmatprep.subr.mxu0 0.0
        %2286 = vmatpush1.msra.mxu0 0.0
        %2287 = vmatprep.subr.mxu0 0.0
        %2288 = vmatpush1.msra.mxu0 0.0
        %2289 = vmatprep.subr.mxu0 0.0
        %2290 = vmatpush1.msra.mxu0 0.0
        %2291 = vmatprep.subr.mxu0 0.0
        %2292 = vmatpush1.msra.mxu0 0.0
        %2293 = vmatprep.subr.mxu0 0.0
        %2294 = vmatpush1.msra.mxu0 0.0
        %2295 = vmatprep.subr.mxu0 0.0
        %2296 = vmatpush1.msra.mxu0 0.0
        %2297 = vmatprep.subr.mxu0 0.0
        %2298 = vmatpush1.msra.mxu0 0.0
        %2299 = vmatprep.subr.mxu0 0.0
        %2300 = vmatpush1.msra.mxu0 0.0
        %2301 = vmatprep.subr.mxu0 0.0
        %2302 = vmatpush1.msra.mxu0 0.0
        %2303 = vmatprep.subr.mxu0 0.0
        %2304 = vmatpush1.msra.mxu0 0.0
        %2305 = vmatprep.subr.mxu0 0.0
        %2306 = vmatpush1.msra.mxu0 0.0
        %2307 = vmatprep.subr.mxu0 0.0
        %2308 = vmatpush1.msra.mxu0 0.0
        %2309 = vmatprep.subr.mxu0 0.0
        %2310 = vmatpush1.msra.mxu0 0.0
        %2311 = vmatprep.subr.mxu0 0.0
        %2312 = vmatpush1.msra.mxu0 0.0
        %2313 = vmatprep.mubr.f32.mxu0 0.0
        %v2314 = vand.u32 %v2243, 4294901760
        %v2315 = vsub.f32 %v2243, %v2314
        %v2316 = vand.u32 %v2315, 4294901760
        %v2317 = vsub.f32 %v2315, %v2316
        %v2318 = vand.u32 %v2317, 4294901760
        %2319 = vmatmul.mubr.f32.gmra.mrb[0].mxu0 %v2318
        %v2320 = vpop.f32.mrb[0].mxu0
        %v2321 = vadd.f32 0.0, %v2320
        %v2322 = vpop.f32.mrb[0].mxu0
        %2323 = vmatprep.mubr.f32.mxu0 0.0
        %v2324 = vand.u32 %v2245, 4294901760
        %v2325 = vsub.f32 %v2245, %v2324
        %v2326 = vand.u32 %v2325, 4294901760
        %v2327 = vsub.f32 %v2325, %v2326
        %v2328 = vand.u32 %v2327, 4294901760
        %2329 = vmatmul.mubr.f32.gmra.mrb[0].mxu0 %v2328
        %v2330 = vpop.f32.mrb[0].mxu0
        %v2331 = vadd.f32 0.0, %v2330
        %v2332 = vpop.f32.mrb[0].mxu0
        %2333 = vdwg.mxu0
        %2334 = vmatprep.subr.mxu0 0.0
        %v2335 = vand.u32 %v2235, 4294901760
        %v2336 = vsub.f32 %v2235, %v2335
        %v2337 = vand.u32 %v2336, 4294901760
        %v2338 = vsub.f32 %v2336, %v2337
        %v2339 = vand.u32 %v2338, 4294901760
        %2340 = vmatpush1.msra.mxu0 %v2339
        %2341 = vmatprep.subr.mxu0 0.0
        %v2342 = vand.u32 %v2236, 4294901760
        %v2343 = vsub.f32 %v2236, %v2342
        %v2344 = vand.u32 %v2343, 4294901760
        %v2345 = vsub.f32 %v2343, %v2344
        %v2346 = vand.u32 %v2345, 4294901760
        %2347 = vmatpush1.msra.mxu0 %v2346
        %2348 = vmatprep.subr.mxu0 0.0
        %2349 = vmatpush1.msra.mxu0 0.0
        %2350 = vmatprep.subr.mxu0 0.0
        %2351 = vmatpush1.msra.mxu0 0.0
        %2352 = vmatprep.subr.mxu0 0.0
        %2353 = vmatpush1.msra.mxu0 0.0
        %2354 = vmatprep.subr.mxu0 0.0
        %2355 = vmatpush1.msra.mxu0 0.0
        %2356 = vmatprep.subr.mxu0 0.0
        %2357 = vmatpush1.msra.mxu0 0.0
        %2358 = vmatprep.subr.mxu0 0.0
        %2359 = vmatpush1.msra.mxu0 0.0
        %2360 = vmatprep.subr.mxu0 0.0
        %2361 = vmatpush1.msra.mxu0 0.0
        %2362 = vmatprep.subr.mxu0 0.0
        %2363 = vmatpush1.msra.mxu0 0.0
        %2364 = vmatprep.subr.mxu0 0.0
        %2365 = vmatpush1.msra.mxu0 0.0
        %2366 = vmatprep.subr.mxu0 0.0
        %2367 = vmatpush1.msra.mxu0 0.0
        %2368 = vmatprep.subr.mxu0 0.0
        %2369 = vmatpush1.msra.mxu0 0.0
        %2370 = vmatprep.subr.mxu0 0.0
        %2371 = vmatpush1.msra.mxu0 0.0
        %2372 = vmatprep.subr.mxu0 0.0
        %2373 = vmatpush1.msra.mxu0 0.0
        %2374 = vmatprep.subr.mxu0 0.0
        %2375 = vmatpush1.msra.mxu0 0.0
        %2376 = vmatprep.subr.mxu0 0.0
        %2377 = vmatpush1.msra.mxu0 0.0
        %2378 = vmatprep.subr.mxu0 0.0
        %2379 = vmatpush1.msra.mxu0 0.0
        %2380 = vmatprep.subr.mxu0 0.0
        %2381 = vmatpush1.msra.mxu0 0.0
        %2382 = vmatprep.subr.mxu0 0.0
        %2383 = vmatpush1.msra.mxu0 0.0
        %2384 = vmatprep.subr.mxu0 0.0
        %2385 = vmatpush1.msra.mxu0 0.0
        %2386 = vmatprep.subr.mxu0 0.0
        %2387 = vmatpush1.msra.mxu0 0.0
        %2388 = vmatprep.subr.mxu0 0.0
        %2389 = vmatpush1.msra.mxu0 0.0
        %2390 = vmatprep.subr.mxu0 0.0
        %2391 = vmatpush1.msra.mxu0 0.0
        %2392 = vmatprep.subr.mxu0 0.0
        %2393 = vmatpush1.msra.mxu0 0.0
        %2394 = vmatprep.subr.mxu0 0.0
        %2395 = vmatpush1.msra.mxu0 0.0
        %2396 = vmatprep.subr.mxu0 0.0
        %2397 = vmatpush1.msra.mxu0 0.0
        %2398 = vmatprep.subr.mxu0 0.0
        %2399 = vmatpush1.msra.mxu0 0.0
        %2400 = vmatprep.subr.mxu0 0.0
        %2401 = vmatpush1.msra.mxu0 0.0
        %2402 = vmatprep.subr.mxu0 0.0
        %2403 = vmatpush1.msra.mxu0 0.0
        %2404 = vmatprep.subr.mxu0 0.0
        %2405 = vmatpush1.msra.mxu0 0.0
        %2406 = vmatprep.subr.mxu0 0.0
        %2407 = vmatpush1.msra.mxu0 0.0
        %2408 = vmatprep.mubr.f32.mxu0 0.0
        %v2409 = vand.u32 %v2243, 4294901760
        %2410 = vmatmul.mubr.f32.gmra.mrb[0].mxu0 %v2409
        %v2411 = vpop.f32.mrb[0].mxu0
        %v2412 = vadd.f32 %v2321, %v2411
        %v2413 = vpop.f32.mrb[0].mxu0
        %2414 = vmatprep.mubr.f32.mxu0 0.0
        %v2415 = vand.u32 %v2245, 4294901760
        %2416 = vmatmul.mubr.f32.gmra.mrb[0].mxu0 %v2415
        %v2417 = vpop.f32.mrb[0].mxu0
        %v2418 = vadd.f32 %v2331, %v2417
        %v2419 = vpop.f32.mrb[0].mxu0
        %2420 = vdwg.mxu0
        %2421 = vmatprep.subr.mxu0 0.0
        %v2422 = vand.u32 %v2235, 4294901760
        %v2423 = vsub.f32 %v2235, %v2422
        %2424 = vmatpush1.msra.mxu0 %v2423
        %2425 = vmatprep.subr.mxu0 0.0
        %v2426 = vand.u32 %v2236, 4294901760
        %v2427 = vsub.f32 %v2236, %v2426
        %2428 = vmatpush1.msra.mxu0 %v2427
        %2429 = vmatprep.subr.mxu0 0.0
        %2430 = vmatpush1.msra.mxu0 0.0
        %2431 = vmatprep.subr.mxu0 0.0
        %2432 = vmatpush1.msra.mxu0 0.0
        %2433 = vmatprep.subr.mxu0 0.0
        %2434 = vmatpush1.msra.mxu0 0.0
        %2435 = vmatprep.subr.mxu0 0.0
        %2436 = vmatpush1.msra.mxu0 0.0
        %2437 = vmatprep.subr.mxu0 0.0
        %2438 = vmatpush1.msra.mxu0 0.0
        %2439 = vmatprep.subr.mxu0 0.0
        %2440 = vmatpush1.msra.mxu0 0.0
        %2441 = vmatprep.subr.mxu0 0.0
        %2442 = vmatpush1.msra.mxu0 0.0
        %2443 = vmatprep.subr.mxu0 0.0
        %2444 = vmatpush1.msra.mxu0 0.0
        %2445 = vmatprep.subr.mxu0 0.0
        %2446 = vmatpush1.msra.mxu0 0.0
        %2447 = vmatprep.subr.mxu0 0.0
        %2448 = vmatpush1.msra.mxu0 0.0
        %2449 = vmatprep.subr.mxu0 0.0
        %2450 = vmatpush1.msra.mxu0 0.0
        %2451 = vmatprep.subr.mxu0 0.0
        %2452 = vmatpush1.msra.mxu0 0.0
        %2453 = vmatprep.subr.mxu0 0.0
        %2454 = vmatpush1.msra.mxu0 0.0
        %2455 = vmatprep.subr.mxu0 0.0
        %2456 = vmatpush1.msra.mxu0 0.0
        %2457 = vmatprep.subr.mxu0 0.0
        %2458 = vmatpush1.msra.mxu0 0.0
        %2459 = vmatprep.subr.mxu0 0.0
        %2460 = vmatpush1.msra.mxu0 0.0
        %2461 = vmatprep.subr.mxu0 0.0
        %2462 = vmatpush1.msra.mxu0 0.0
        %2463 = vmatprep.subr.mxu0 0.0
        %2464 = vmatpush1.msra.mxu0 0.0
        %2465 = vmatprep.subr.mxu0 0.0
        %2466 = vmatpush1.msra.mxu0 0.0
        %2467 = vmatprep.subr.mxu0 0.0
        %2468 = vmatpush1.msra.mxu0 0.0
        %2469 = vmatprep.subr.mxu0 0.0
        %2470 = vmatpush1.msra.mxu0 0.0
        %2471 = vmatprep.subr.mxu0 0.0
        %2472 = vmatpush1.msra.mxu0 0.0
        %2473 = vmatprep.subr.mxu0 0.0
        %2474 = vmatpush1.msra.mxu0 0.0
        %2475 = vmatprep.subr.mxu0 0.0
        %2476 = vmatpush1.msra.mxu0 0.0
        %2477 = vmatprep.subr.mxu0 0.0
        %2478 = vmatpush1.msra.mxu0 0.0
        %2479 = vmatprep.subr.mxu0 0.0
        %2480 = vmatpush1.msra.mxu0 0.0
        %2481 = vmatprep.subr.mxu0 0.0
        %2482 = vmatpush1.msra.mxu0 0.0
        %2483 = vmatprep.subr.mxu0 0.0
        %2484 = vmatpush1.msra.mxu0 0.0
        %2485 = vmatprep.subr.mxu0 0.0
        %2486 = vmatpush1.msra.mxu0 0.0
        %2487 = vmatprep.subr.mxu0 0.0
        %2488 = vmatpush1.msra.mxu0 0.0
        %2489 = vmatprep.mubr.f32.mxu0 0.0
        %v2490 = vand.u32 %v2243, 4294901760
        %v2491 = vsub.f32 %v2243, %v2490
        %2492 = vmatmul.mubr.f32.gmra.mrb[0].mxu0 %v2491
        %v2493 = vpop.f32.mrb[0].mxu0
        %v2494 = vadd.f32 %v2412, %v2493
        %v2495 = vpop.f32.mrb[0].mxu0
        %2496 = vmatprep.mubr.f32.mxu0 0.0
        %v2497 = vand.u32 %v2245, 4294901760
        %v2498 = vsub.f32 %v2245, %v2497
        %2499 = vmatmul.mubr.f32.gmra.mrb[0].mxu0 %v2498
        %v2500 = vpop.f32.mrb[0].mxu0
        %v2501 = vadd.f32 %v2418, %v2500
        %v2502 = vpop.f32.mrb[0].mxu0
        %2503 = vdwg.mxu0
        %2504 = vmatprep.subr.mxu0 0.0
        %v2505 = vand.u32 %v2235, 4294901760
        %2506 = vmatpush1.msra.mxu0 %v2505
        %2507 = vmatprep.subr.mxu0 0.0
        %v2508 = vand.u32 %v2236, 4294901760
        %2509 = vmatpush1.msra.mxu0 %v2508
        %2510 = vmatprep.subr.mxu0 0.0
        %2511 = vmatpush1.msra.mxu0 0.0
        %2512 = vmatprep.subr.mxu0 0.0
        %2513 = vmatpush1.msra.mxu0 0.0
        %2514 = vmatprep.subr.mxu0 0.0
        %2515 = vmatpush1.msra.mxu0 0.0
        %2516 = vmatprep.subr.mxu0 0.0
        %2517 = vmatpush1.msra.mxu0 0.0
        %2518 = vmatprep.subr.mxu0 0.0
        %2519 = vmatpush1.msra.mxu0 0.0
        %2520 = vmatprep.subr.mxu0 0.0
        %2521 = vmatpush1.msra.mxu0 0.0
        %2522 = vmatprep.subr.mxu0 0.0
        %2523 = vmatpush1.msra.mxu0 0.0
        %2524 = vmatprep.subr.mxu0 0.0
        %2525 = vmatpush1.msra.mxu0 0.0
        %2526 = vmatprep.subr.mxu0 0.0
        %2527 = vmatpush1.msra.mxu0 0.0
        %2528 = vmatprep.subr.mxu0 0.0
        %2529 = vmatpush1.msra.mxu0 0.0
        %2530 = vmatprep.subr.mxu0 0.0
        %2531 = vmatpush1.msra.mxu0 0.0
        %2532 = vmatprep.subr.mxu0 0.0
        %2533 = vmatpush1.msra.mxu0 0.0
        %2534 = vmatprep.subr.mxu0 0.0
        %2535 = vmatpush1.msra.mxu0 0.0
        %2536 = vmatprep.subr.mxu0 0.0
        %2537 = vmatpush1.msra.mxu0 0.0
        %2538 = vmatprep.subr.mxu0 0.0
        %2539 = vmatpush1.msra.mxu0 0.0
        %2540 = vmatprep.subr.mxu0 0.0
        %2541 = vmatpush1.msra.mxu0 0.0
        %2542 = vmatprep.subr.mxu0 0.0
        %2543 = vmatpush1.msra.mxu0 0.0
        %2544 = vmatprep.subr.mxu0 0.0
        %2545 = vmatpush1.msra.mxu0 0.0
        %2546 = vmatprep.subr.mxu0 0.0
        %2547 = vmatpush1.msra.mxu0 0.0
        %2548 = vmatprep.subr.mxu0 0.0
        %2549 = vmatpush1.msra.mxu0 0.0
        %2550 = vmatprep.subr.mxu0 0.0
        %2551 = vmatpush1.msra.mxu0 0.0
        %2552 = vmatprep.subr.mxu0 0.0
        %2553 = vmatpush1.msra.mxu0 0.0
        %2554 = vmatprep.subr.mxu0 0.0
        %2555 = vmatpush1.msra.mxu0 0.0
        %2556 = vmatprep.subr.mxu0 0.0
        %2557 = vmatpush1.msra.mxu0 0.0
        %2558 = vmatprep.subr.mxu0 0.0
        %2559 = vmatpush1.msra.mxu0 0.0
        %2560 = vmatprep.subr.mxu0 0.0
        %2561 = vmatpush1.msra.mxu0 0.0
        %2562 = vmatprep.subr.mxu0 0.0
        %2563 = vmatpush1.msra.mxu0 0.0
        %2564 = vmatprep.subr.mxu0 0.0
        %2565 = vmatpush1.msra.mxu0 0.0
        %2566 = vmatprep.subr.mxu0 0.0
        %2567 = vmatpush1.msra.mxu0 0.0
        %2568 = vmatprep.subr.mxu0 0.0
        %2569 = vmatpush1.msra.mxu0 0.0
        %2570 = vmatprep.mubr.f32.mxu0 0.0
        %v2571 = vand.u32 %v2243, 4294901760
        %v2572 = vsub.f32 %v2243, %v2571
        %v2573 = vand.u32 %v2572, 4294901760
        %2574 = vmatmul.mubr.f32.gmra.mrb[0].mxu0 %v2573
        %v2575 = vpop.f32.mrb[0].mxu0
        %v2576 = vadd.f32 %v2494, %v2575
        %v2577 = vpop.f32.mrb[0].mxu0
        %2578 = vmatprep.mubr.f32.mxu0 0.0
        %v2579 = vand.u32 %v2245, 4294901760
        %v2580 = vsub.f32 %v2245, %v2579
        %v2581 = vand.u32 %v2580, 4294901760
        %2582 = vmatmul.mubr.f32.gmra.mrb[0].mxu0 %v2581
        %v2583 = vpop.f32.mrb[0].mxu0
        %v2584 = vadd.f32 %v2501, %v2583
        %v2585 = vpop.f32.mrb[0].mxu0
        %2586 = vdwg.mxu0
        %2587 = vmatprep.subr.mxu0 0.0
        %v2588 = vand.u32 %v2235, 4294901760
        %v2589 = vsub.f32 %v2235, %v2588
        %v2590 = vand.u32 %v2589, 4294901760
        %2591 = vmatpush1.msra.mxu0 %v2590
        %2592 = vmatprep.subr.mxu0 0.0
        %v2593 = vand.u32 %v2236, 4294901760
        %v2594 = vsub.f32 %v2236, %v2593
        %v2595 = vand.u32 %v2594, 4294901760
        %2596 = vmatpush1.msra.mxu0 %v2595
        %2597 = vmatprep.subr.mxu0 0.0
        %2598 = vmatpush1.msra.mxu0 0.0
        %2599 = vmatprep.subr.mxu0 0.0
        %2600 = vmatpush1.msra.mxu0 0.0
        %2601 = vmatprep.subr.mxu0 0.0
        %2602 = vmatpush1.msra.mxu0 0.0
        %2603 = vmatprep.subr.mxu0 0.0
        %2604 = vmatpush1.msra.mxu0 0.0
        %2605 = vmatprep.subr.mxu0 0.0
        %2606 = vmatpush1.msra.mxu0 0.0
        %2607 = vmatprep.subr.mxu0 0.0
        %2608 = vmatpush1.msra.mxu0 0.0
        %2609 = vmatprep.subr.mxu0 0.0
        %2610 = vmatpush1.msra.mxu0 0.0
        %2611 = vmatprep.subr.mxu0 0.0
        %2612 = vmatpush1.msra.mxu0 0.0
        %2613 = vmatprep.subr.mxu0 0.0
        %2614 = vmatpush1.msra.mxu0 0.0
        %2615 = vmatprep.subr.mxu0 0.0
        %2616 = vmatpush1.msra.mxu0 0.0
        %2617 = vmatprep.subr.mxu0 0.0
        %2618 = vmatpush1.msra.mxu0 0.0
        %2619 = vmatprep.subr.mxu0 0.0
        %2620 = vmatpush1.msra.mxu0 0.0
        %2621 = vmatprep.subr.mxu0 0.0
        %2622 = vmatpush1.msra.mxu0 0.0
        %2623 = vmatprep.subr.mxu0 0.0
        %2624 = vmatpush1.msra.mxu0 0.0
        %2625 = vmatprep.subr.mxu0 0.0
        %2626 = vmatpush1.msra.mxu0 0.0
        %2627 = vmatprep.subr.mxu0 0.0
        %2628 = vmatpush1.msra.mxu0 0.0
        %2629 = vmatprep.subr.mxu0 0.0
        %2630 = vmatpush1.msra.mxu0 0.0
        %2631 = vmatprep.subr.mxu0 0.0
        %2632 = vmatpush1.msra.mxu0 0.0
        %2633 = vmatprep.subr.mxu0 0.0
        %2634 = vmatpush1.msra.mxu0 0.0
        %2635 = vmatprep.subr.mxu0 0.0
        %2636 = vmatpush1.msra.mxu0 0.0
        %2637 = vmatprep.subr.mxu0 0.0
        %2638 = vmatpush1.msra.mxu0 0.0
        %2639 = vmatprep.subr.mxu0 0.0
        %2640 = vmatpush1.msra.mxu0 0.0
        %2641 = vmatprep.subr.mxu0 0.0
        %2642 = vmatpush1.msra.mxu0 0.0
        %2643 = vmatprep.subr.mxu0 0.0
        %2644 = vmatpush1.msra.mxu0 0.0
        %2645 = vmatprep.subr.mxu0 0.0
        %2646 = vmatpush1.msra.mxu0 0.0
        %2647 = vmatprep.subr.mxu0 0.0
        %2648 = vmatpush1.msra.mxu0 0.0
        %2649 = vmatprep.subr.mxu0 0.0
        %2650 = vmatpush1.msra.mxu0 0.0
        %2651 = vmatprep.subr.mxu0 0.0
        %2652 = vmatpush1.msra.mxu0 0.0
        %2653 = vmatprep.subr.mxu0 0.0
        %2654 = vmatpush1.msra.mxu0 0.0
        %2655 = vmatprep.subr.mxu0 0.0
        %2656 = vmatpush1.msra.mxu0 0.0
        %2657 = vmatprep.mubr.f32.mxu0 0.0
        %v2658 = vand.u32 %v2243, 4294901760
        %2659 = vmatmul.mubr.f32.gmra.mrb[0].mxu0 %v2658
        %v2660 = vpop.f32.mrb[0].mxu0
        %v2661 = vadd.f32 %v2576, %v2660
        %v2662 = vpop.f32.mrb[0].mxu0
        %2663 = vmatprep.mubr.f32.mxu0 0.0
        %v2664 = vand.u32 %v2245, 4294901760
        %2665 = vmatmul.mubr.f32.gmra.mrb[0].mxu0 %v2664
        %v2666 = vpop.f32.mrb[0].mxu0
        %v2667 = vadd.f32 %v2584, %v2666
        %v2668 = vpop.f32.mrb[0].mxu0
        %2669 = vdwg.mxu0
        %2670 = vmatprep.subr.mxu0 0.0
        %v2671 = vand.u32 %v2235, 4294901760
        %2672 = vmatpush1.msra.mxu0 %v2671
        %2673 = vmatprep.subr.mxu0 0.0
        %v2674 = vand.u32 %v2236, 4294901760
        %2675 = vmatpush1.msra.mxu0 %v2674
        %2676 = vmatprep.subr.mxu0 0.0
        %2677 = vmatpush1.msra.mxu0 0.0
        %2678 = vmatprep.subr.mxu0 0.0
        %2679 = vmatpush1.msra.mxu0 0.0
        %2680 = vmatprep.subr.mxu0 0.0
        %2681 = vmatpush1.msra.mxu0 0.0
        %2682 = vmatprep.subr.mxu0 0.0
        %2683 = vmatpush1.msra.mxu0 0.0
        %2684 = vmatprep.subr.mxu0 0.0
        %2685 = vmatpush1.msra.mxu0 0.0
        %2686 = vmatprep.subr.mxu0 0.0
        %2687 = vmatpush1.msra.mxu0 0.0
        %2688 = vmatprep.subr.mxu0 0.0
        %2689 = vmatpush1.msra.mxu0 0.0
        %2690 = vmatprep.subr.mxu0 0.0
        %2691 = vmatpush1.msra.mxu0 0.0
        %2692 = vmatprep.subr.mxu0 0.0
        %2693 = vmatpush1.msra.mxu0 0.0
        %2694 = vmatprep.subr.mxu0 0.0
        %2695 = vmatpush1.msra.mxu0 0.0
        %2696 = vmatprep.subr.mxu0 0.0
        %2697 = vmatpush1.msra.mxu0 0.0
        %2698 = vmatprep.subr.mxu0 0.0
        %2699 = vmatpush1.msra.mxu0 0.0
        %2700 = vmatprep.subr.mxu0 0.0
        %2701 = vmatpush1.msra.mxu0 0.0
        %2702 = vmatprep.subr.mxu0 0.0
        %2703 = vmatpush1.msra.mxu0 0.0
        %2704 = vmatprep.subr.mxu0 0.0
        %2705 = vmatpush1.msra.mxu0 0.0
        %2706 = vmatprep.subr.mxu0 0.0
        %2707 = vmatpush1.msra.mxu0 0.0
        %2708 = vmatprep.subr.mxu0 0.0
        %2709 = vmatpush1.msra.mxu0 0.0
        %2710 = vmatprep.subr.mxu0 0.0
        %2711 = vmatpush1.msra.mxu0 0.0
        %2712 = vmatprep.subr.mxu0 0.0
        %2713 = vmatpush1.msra.mxu0 0.0
        %2714 = vmatprep.subr.mxu0 0.0
        %2715 = vmatpush1.msra.mxu0 0.0
        %2716 = vmatprep.subr.mxu0 0.0
        %2717 = vmatpush1.msra.mxu0 0.0
        %2718 = vmatprep.subr.mxu0 0.0
        %2719 = vmatpush1.msra.mxu0 0.0
        %2720 = vmatprep.subr.mxu0 0.0
        %2721 = vmatpush1.msra.mxu0 0.0
        %2722 = vmatprep.subr.mxu0 0.0
        %2723 = vmatpush1.msra.mxu0 0.0
        %2724 = vmatprep.subr.mxu0 0.0
        %2725 = vmatpush1.msra.mxu0 0.0
        %2726 = vmatprep.subr.mxu0 0.0
        %2727 = vmatpush1.msra.mxu0 0.0
        %2728 = vmatprep.subr.mxu0 0.0
        %2729 = vmatpush1.msra.mxu0 0.0
        %2730 = vmatprep.subr.mxu0 0.0
        %2731 = vmatpush1.msra.mxu0 0.0
        %2732 = vmatprep.subr.mxu0 0.0
        %2733 = vmatpush1.msra.mxu0 0.0
        %2734 = vmatprep.subr.mxu0 0.0
        %2735 = vmatpush1.msra.mxu0 0.0
        %2736 = vmatprep.mubr.f32.mxu0 0.0
        %v2737 = vand.u32 %v2243, 4294901760
        %2738 = vmatmul.mubr.f32.gmra.mrb[0].mxu0 %v2737
        %v2739 = vpop.f32.mrb[0].mxu0
        %v2740 = vadd.f32 %v2661, %v2739
        %v2741 = vpop.f32.mrb[0].mxu0
        %2742 = vmatprep.mubr.f32.mxu0 0.0
        %v2743 = vand.u32 %v2245, 4294901760
        %2744 = vmatmul.mubr.f32.gmra.mrb[0].mxu0 %v2743
        %v2745 = vpop.f32.mrb[0].mxu0
        %v2746 = vadd.f32 %v2667, %v2745
        %v2747 = vpop.f32.mrb[0].mxu0
        %2748 = vdwg.mxu0
        %v2749 = vadd.f32 %v2232, %v2740
        %v2750 = vadd.f32 %v2233, %v2746
        %2751 = vst [vmem:[%s160] sm:$0xff] %v2749
        %2752 = vst [vmem:[%s160 + $0x8] sm:$0xff] %v2750
        %s2753 = sand.u32 %s87, 1
        %s2754 = scalar_lea.sflag [#allocation3], %s2753
        %s2755 = sand.u32 %s87, 1
        %s2756 = smul.addr %s2755, 16
        %s2757 = scalar_lea.vmem [#allocation2], %s2756
        // Predicated region
        $region29: #{tpu_custom_call.1} parent=27 // pred_check
          %p2758 = pneg %p97
        $region30: #{tpu_custom_call.1} parent=27 // pred_check_branch
          %2760 = sbr.rel (%p2758) target = $region32
        $region31: #{tpu_custom_call.1} parent=27 // pred_region
          %s2762 = ssub.s32 256, 256
          %2763 = vsyncadd %s2754, %s2762
          %s2764 = smul.addr %s21, 2
          %s2765 = smul.addr %s20, 8
          %s2766 = sadd.s32 %s2764, %s2765
          %s2767 = smul.addr %s2766, 128
          %s2768 = scalar_lea.hbm %s2, %s2767
          %s2769 = sshll.u32 %s2757, 4
          %s2770 = int_to_ptr.vmem [resolvable:$true] %s2769
          %2775 = dma.vmem_to_hbm [thread:$0]  %s2770, 256, %s2768, %s2754, 128, 128, 8
        $region32: #{tpu_custom_call.1} parent=27 // pred_fallthru
          _
      $region28: #{tpu_custom_call.1} parent=5 // pred_fallthru
        _
      %p2776 = scmp.le.s32.totalorder 2, %s11
      // Predicated region
      $region33: #{tpu_custom_call.1} parent=5 // pred_check
        %p2777 = pneg %p2776
      $region34: #{tpu_custom_call.1} parent=5 // pred_check_branch
        %2779 = sbr.rel (%p2777) target = $region36
      $region35: #{tpu_custom_call.1} parent=5 // pred_region
        %s2780 = ssub.s32 %s11, 2
        // Predicated region
        $region37: #{tpu_custom_call.1} parent=35 // pred_check
          %p2781 = pneg %p103
        $region38: #{tpu_custom_call.1} parent=35 // pred_check_branch
          %2783 = sbr.rel (%p2781) target = $region40
        $region39: #{tpu_custom_call.1} parent=35 // pred_region
          %s2784 = sand.u32 %s88, 1
          %s2785 = scalar_lea.sflag [#allocation3], %s2784
          %s2786 = sand.u32 %s88, 1
          %s2787 = smul.addr %s2786, 16
          %s2788 = scalar_lea.vmem [#allocation2], %s2787
          %2789 = dma.done %s2785, 256
        $region40: #{tpu_custom_call.1} parent=35 // pred_fallthru
          _
      $region36: #{tpu_custom_call.1} parent=5 // pred_fallthru
        _
    $region6: #{tpu_custom_call.1} parent=1 // loop_footer
      %s15 = sadd.s32 1, %s11
    $region7: #{tpu_custom_call.1} parent=1 // loop_footer_branch
      %10 = sbr.rel target = $region3
    $region8: #{tpu_custom_call.1} parent=1 // loop_exit
      _
    %2790 = vsyncpa [#allocation3], 1
    %s2791 = scalar_lea.sflag [#allocation3], 1
    %2792 = vsyncpa %s2791, 1

</llo_original>
